<compile_context>
chip_gen: v5e
topology: v5e:2x2
jax: 0.10.0
libtpu: 0.0.40
codegen_flags: <defaults>
</compile_context>

<pallas_src>
import functools

import jax
import jax.numpy as jnp
from jax.experimental import pallas as pl
from jax.experimental.pallas import tpu as pltpu

LANE = 128


def _round_up(x, m):
    return ((x + m - 1) // m) * m


def _pick_row_tile(Ho, Wo, cout_p, out_itemsize, budget_bytes=8 << 20):
    """Largest divisor of Ho whose double-buffered output tile fits the budget.

    Prefers >= 2 row tiles (so the row axis can be sharded across v7x's two
    TensorCores even at batch 1) unless that would make tiles < 8 rows.
    """
    divisors = [t for t in range(1, Ho + 1) if Ho % t == 0]
    fits = [t for t in divisors
            if 2 * t * Wo * cout_p * out_itemsize <= budget_bytes] or [1]
    th = max(fits)
    if th == Ho:
        split = [t for t in fits if t < Ho and t >= 8]
        if split:
            th = max(split)
    return th


@functools.lru_cache(maxsize=None)
def _unaligned_lane_concat_ok(n_pieces, width, dtype_name):
    """Probe (once) whether Mosaic lowers an unaligned lane-axis concatenate of
    n_pieces (8, width) tiles — required by the single fused-K matmul path.
    Falls back to the per-tap-matmul kernel when unsupported/incorrect."""
    if n_pieces <= 1 or width % LANE == 0:
        return True
    dtype = jnp.dtype(dtype_name)

    def kern(a_ref, o_ref):
        o_ref[...] = jnp.concatenate([a_ref[i] for i in range(n_pieces)],
                                     axis=-1)

    try:
        a = jnp.arange(n_pieces * 8 * width, dtype=jnp.float32)
        a = a.reshape(n_pieces, 8, width).astype(dtype)
        out = pl.pallas_call(
            kern,
            out_shape=jax.ShapeDtypeStruct((8, n_pieces * width), dtype),
        )(a)
        expected = jnp.concatenate([a[i] for i in range(n_pieces)], axis=-1)
        return bool(jnp.all(out == expected))
    except Exception:
        return False


# --------------------------------------------------------------------------
# Kernel: one grid step = (one batch image, one tile of TH output rows).
# --------------------------------------------------------------------------
def _wnconv_kernel(x_ref, w_ref, scale_ref, bias_ref, o_ref, *,
                   KH, KW, TH, Wo, stride, dilation, fold):
    """x_ref:     (1, Hp, Wp, Cin)   whole spatially padded NHWC image (resident)
       w_ref:     (K_pad, Cout_pad)  if fold else (KH*KW, Cin, Cout_pad)
       scale_ref: (1, Cout_pad)      g / ||v||  (f32)
       bias_ref:  (1, Cout_pad)      bias       (f32, zero in padded channels)
       o_ref:     (1, TH, Wo, Cout_pad)
    """
    cin = x_ref.shape[-1]
    cout_p = o_ref.shape[-1]
    r = pl.program_id(1)
    row_base = pl.multiple_of(r * (TH * stride), TH * stride)

    def tap_window(kh, kw):
        # Slice the Ref directly (no materialized full image / value slices).
        h0 = row_base + kh * dilation
        w0 = kw * dilation
        if stride == 1:
            win = x_ref[0, pl.ds(h0, TH), pl.ds(w0, Wo), :]
        else:
            # TODO(synk): for stride > 1, pre-decimate per phase in the wrapper
            # (or band the input via manual DMA) instead of strided reads, so
            # only rows/cols actually used are touched.
            win = x_ref[0, pl.ds(h0, TH, stride=stride),
                        pl.ds(w0, Wo, stride=stride), :]
        return win.reshape(TH * Wo, cin)

    pieces = [tap_window(kh, kw) for kh in range(KH) for kw in range(KW)]

    if fold:
        # Single MXU contraction over K = KH*KW*Cin (padded to a sublane
        # multiple in the wrapper): no per-tap accumulator RMW passes.
        k = len(pieces) * cin
        k_pad = w_ref.shape[0]
        if k_pad > k:
            pieces.append(jnp.zeros((TH * Wo, k_pad - k), pieces[0].dtype))
        lhs = pieces[0] if len(pieces) == 1 else jnp.concatenate(pieces, axis=-1)
        acc = jnp.dot(lhs, w_ref[...], preferred_element_type=jnp.float32)
    else:
        # Fallback: per-tap K=Cin matmuls accumulated in vregs.
        acc = jnp.zeros((TH * Wo, cout_p), jnp.float32)
        for t, piece in enumerate(pieces):
            acc += jnp.dot(piece, w_ref[t], preferred_element_type=jnp.float32)

    # Fused epilogue: per-channel weight-norm scale + bias, lane-dense store.
    out = acc * scale_ref[...] + bias_ref[...]
    o_ref[0] = out.reshape(TH, Wo, cout_p).astype(o_ref.dtype)


# --------------------------------------------------------------------------
# Wrapper (PyTorch-facing NCHW interface)
# --------------------------------------------------------------------------
@functools.partial(jax.jit, static_argnames=("stride", "padding", "dilation",
                                              "compute_dtype", "out_layout",
                                              "fold"))
def _wn_conv2d_impl(x, v, g, bias, *, stride, padding, dilation,
                    compute_dtype, out_layout, fold):
    N, Cin, H, W = x.shape
    Cout, _, KH, KW = v.shape
    cdt = jnp.dtype(compute_dtype)
    out_dtype = x.dtype

    Ho = (H + 2 * padding - dilation * (KH - 1) - 1) // stride + 1
    Wo = (W + 2 * padding - dilation * (KW - 1) - 1) // stride + 1

    # Matmul-N / store granularity: 128 fills v5e's 128x128 MXU; multiples of
    # 256 when Cout allows, to fill v6e/v7x's 256-wide MXU columns.
    cout_p = LANE if Cout <= LANE else _round_up(Cout, 2 * LANE)

    # Weight-norm per-channel scale: tiny f32 reduction done in plain JAX.
    # (No eps, matching torch weight_norm: assumes no all-zero filter.)
    v32 = v.astype(jnp.float32)
    scale = g.astype(jnp.float32) * jax.lax.rsqrt(jnp.sum(v32 * v32, axis=(1, 2, 3)))
    scale_row = jnp.pad(scale, (0, cout_p - Cout)).reshape(1, cout_p)
    bias_row = jnp.pad(bias.astype(jnp.float32), (0, cout_p - Cout)).reshape(1, cout_p)

    # Filters -> (K, Cout_pad), K ordered (kh, kw, cin) to match the kernel's
    # window concatenation; K zero-padded to 8 (f32) / 16 (bf16) sublanes.
    n_taps = KH * KW
    K = n_taps * Cin
    if fold and n_taps > 1:
        kmult = 8 if cdt.itemsize >= 4 else 16
        K_pad = _round_up(K, kmult)
    else:
        K_pad = K
    w = jnp.transpose(v.astype(cdt), (2, 3, 1, 0)).reshape(K, Cout)
    w = jnp.pad(w, ((0, K_pad - K), (0, cout_p - Cout)))
    if not fold:
        w = w.reshape(n_taps, Cin, cout_p)

    # Cast BEFORE the layout pass so the transpose/pad and the input DMA move
    # the narrow dtype (halves HBM traffic for bf16 — matters most on v5e).
    xp = jnp.pad(jnp.transpose(x.astype(cdt), (0, 2, 3, 1)),
                 ((0, 0), (padding, padding), (padding, padding), (0, 0)))
    Hp, Wp = xp.shape[1], xp.shape[2]

    TH = _pick_row_tile(Ho, Wo, cout_p, jnp.dtype(out_dtype).itemsize)
    R = Ho // TH

    kernel = functools.partial(_wnconv_kernel, KH=KH, KW=KW, TH=TH, Wo=Wo,
                               stride=stride, dilation=dilation, fold=fold)
    w_index_map = (lambda n, r: (0, 0)) if fold else (lambda n, r: (0, 0, 0))

    # TODO(synk): for images / Cin too large to keep one padded input image
    # resident in VMEM (esp. v7x's 64 MiB), band the input over rows with a
    # (KH-1)*dilation halo via memory_space=pl.ANY + pltpu.make_async_copy.
    out = pl.pallas_call(
        kernel,
        out_shape=jax.ShapeDtypeStruct((N, Ho, Wo, cout_p), out_dtype),
        grid=(N, R),
        in_specs=[
            # Whole padded image per batch; index_map ignores the row axis so
            # the block stays resident across row tiles (one DMA per image).
            pl.BlockSpec((1, Hp, Wp, Cin), lambda n, r: (n, 0, 0, 0)),
            # Weights / scale / bias: constant index_maps -> resident in VMEM
            # for the whole grid (never re-fetched per tile).
            pl.BlockSpec(w.shape, w_index_map),
            pl.BlockSpec((1, cout_p), lambda n, r: (0, 0)),
            pl.BlockSpec((1, cout_p), lambda n, r: (0, 0)),
        ],
        out_specs=pl.BlockSpec((1, TH, Wo, cout_p), lambda n, r: (n, r, 0, 0)),
        compiler_params=pltpu.CompilerParams(
            dimension_semantics=("parallel", "parallel"),
            vmem_limit_bytes=64 * 1024 * 1024),
    )(xp, w, scale_row, bias_row)

    out = out[..., :Cout]
    if out_layout == "NHWC":
        return out
    # TODO(synk): with very small Cout the padded-channel writeback + this
    # NHWC->NCHW relayout dominate HBM traffic on v5e/v6e; prefer
    # out_layout="NHWC" when the consumer can take channels-last.
    return jnp.transpose(out, (0, 3, 1, 2))


def wn_conv2d(x, v, g, bias=None, *, stride, padding, dilation=1,
              compute_dtype=None, out_layout="NCHW"):
    """x: (N, Cin, H, W) NCHW -> y: (N, Cout, Ho, Wo) NCHW (like PyTorch)."""
    cdt = jnp.dtype(compute_dtype) if compute_dtype is not None else x.dtype
    Cout, Cin, KH, KW = v.shape
    if bias is None:
        bias = jnp.zeros((Cout,), jnp.float32)
    # Decide (once per config) whether the single fused-K matmul path lowers.
    fold = (KH * KW == 1) or _unaligned_lane_concat_ok(KH * KW, Cin, cdt.name)
    return _wn_conv2d_impl(x, v, g, bias, stride=stride, padding=padding,
                           dilation=dilation, compute_dtype=cdt.name,
                           out_layout=out_layout, fold=fold)


# --------------------------------------------------------------------------
if __name__ == "__main__":
    # Module hyperparameters (small, consistent with the PyTorch module).
    in_channels, out_channels = 4, 8
    kernel_size, padding, stride, dilation = 3, 1, 1, 1

    key = jax.random.PRNGKey(0)
    kx, kv, kg, kb = jax.random.split(key, 4)

    # Deterministic synthetic parameters:
    #   v ~ U(-0.01, 0.01)  (mirrors torch.nn.init.uniform_(weight, -0.01, 0.01))
    #   g positive per-channel gain, bias ~ U(-0.1, 0.1)
    v = jax.random.uniform(kv, (out_channels, in_channels, kernel_size, kernel_size),
                           jnp.float32, minval=-0.01, maxval=0.01)
    g = jax.random.uniform(kg, (out_channels,), jnp.float32, minval=0.5, maxval=1.5)
    b = jax.random.uniform(kb, (out_channels,), jnp.float32, minval=-0.1, maxval=0.1)
    x = jax.random.normal(kx, (2, in_channels, 16, 16), jnp.float32)

    y = wn_conv2d(x, v, g, b, stride=stride, padding=padding, dilation=dilation)
    y = jax.block_until_ready(y)

    # Reference: XLA conv with weight-norm applied in plain JAX.
    norm = jnp.sqrt(jnp.sum(v * v, axis=(1, 2, 3), keepdims=True))
    w_ref = v * (g[:, None, None, None] / norm)
    y_ref = jax.lax.conv_general_dilated(
        x, w_ref, window_strides=(stride, stride),
        padding=[(padding, padding), (padding, padding)],
        rhs_dilation=(dilation, dilation),
        dimension_numbers=("NCHW", "OIHW", "NCHW"),
    ) + b[None, :, None, None]

    assert y.shape == y_ref.shape == (2, out_channels, 16, 16)
    assert jnp.allclose(y, y_ref, rtol=1e-3, atol=1e-4), "mismatch vs XLA reference"

    print("KERNEL_OK")
</pallas_src>

<mosaic_0001>
module attributes {stable_mosaic.version = 11 : i64} {
  func.func @kern(%arg0: memref<9x8x4xf32, #tpu.memory_space<vmem>>, %arg1: memref<8x36xf32, #tpu.memory_space<vmem>>) attributes {dimension_semantics = [], scalar_prefetch = 0 : i64, scratch_operands = 0 : i64, tpu.core_type = #tpu.core_type<tc>} {
    %c0 = arith.constant 0 : index
    %c0_0 = arith.constant 0 : index
    %c0_1 = arith.constant 0 : index
    %0 = vector.load %arg0[%c0, %c0_0, %c0_1] : memref<9x8x4xf32, #tpu.memory_space<vmem>>, vector<1x8x4xf32>
    %1 = vector.shape_cast %0 : vector<1x8x4xf32> to vector<8x4xf32>
    %c1 = arith.constant 1 : index
    %c0_2 = arith.constant 0 : index
    %c0_3 = arith.constant 0 : index
    %2 = vector.load %arg0[%c1, %c0_2, %c0_3] : memref<9x8x4xf32, #tpu.memory_space<vmem>>, vector<1x8x4xf32>
    %3 = vector.shape_cast %2 : vector<1x8x4xf32> to vector<8x4xf32>
    %c2 = arith.constant 2 : index
    %c0_4 = arith.constant 0 : index
    %c0_5 = arith.constant 0 : index
    %4 = vector.load %arg0[%c2, %c0_4, %c0_5] : memref<9x8x4xf32, #tpu.memory_space<vmem>>, vector<1x8x4xf32>
    %5 = vector.shape_cast %4 : vector<1x8x4xf32> to vector<8x4xf32>
    %c3 = arith.constant 3 : index
    %c0_6 = arith.constant 0 : index
    %c0_7 = arith.constant 0 : index
    %6 = vector.load %arg0[%c3, %c0_6, %c0_7] : memref<9x8x4xf32, #tpu.memory_space<vmem>>, vector<1x8x4xf32>
    %7 = vector.shape_cast %6 : vector<1x8x4xf32> to vector<8x4xf32>
    %c4 = arith.constant 4 : index
    %c0_8 = arith.constant 0 : index
    %c0_9 = arith.constant 0 : index
    %8 = vector.load %arg0[%c4, %c0_8, %c0_9] : memref<9x8x4xf32, #tpu.memory_space<vmem>>, vector<1x8x4xf32>
    %9 = vector.shape_cast %8 : vector<1x8x4xf32> to vector<8x4xf32>
    %c5 = arith.constant 5 : index
    %c0_10 = arith.constant 0 : index
    %c0_11 = arith.constant 0 : index
    %10 = vector.load %arg0[%c5, %c0_10, %c0_11] : memref<9x8x4xf32, #tpu.memory_space<vmem>>, vector<1x8x4xf32>
    %11 = vector.shape_cast %10 : vector<1x8x4xf32> to vector<8x4xf32>
    %c6 = arith.constant 6 : index
    %c0_12 = arith.constant 0 : index
    %c0_13 = arith.constant 0 : index
    %12 = vector.load %arg0[%c6, %c0_12, %c0_13] : memref<9x8x4xf32, #tpu.memory_space<vmem>>, vector<1x8x4xf32>
    %13 = vector.shape_cast %12 : vector<1x8x4xf32> to vector<8x4xf32>
    %c7 = arith.constant 7 : index
    %c0_14 = arith.constant 0 : index
    %c0_15 = arith.constant 0 : index
    %14 = vector.load %arg0[%c7, %c0_14, %c0_15] : memref<9x8x4xf32, #tpu.memory_space<vmem>>, vector<1x8x4xf32>
    %15 = vector.shape_cast %14 : vector<1x8x4xf32> to vector<8x4xf32>
    %c8 = arith.constant 8 : index
    %c0_16 = arith.constant 0 : index
    %c0_17 = arith.constant 0 : index
    %16 = vector.load %arg0[%c8, %c0_16, %c0_17] : memref<9x8x4xf32, #tpu.memory_space<vmem>>, vector<1x8x4xf32>
    %17 = vector.shape_cast %16 : vector<1x8x4xf32> to vector<8x4xf32>
    %18 = tpu.concatenate %1, %3, %5, %7, %9, %11, %13, %15, %17 in 1 : vector<8x4xf32>, vector<8x4xf32>, vector<8x4xf32>, vector<8x4xf32>, vector<8x4xf32>, vector<8x4xf32>, vector<8x4xf32>, vector<8x4xf32>, vector<8x4xf32> -> vector<8x36xf32>
    %c0_18 = arith.constant 0 : index
    %c0_19 = arith.constant 0 : index
    %19 = vector.load %arg1[%c0_18, %c0_19] : memref<8x36xf32, #tpu.memory_space<vmem>>, vector<8x36xf32>
    tpu.vector_store %arg1[%c0_18, %c0_19], %18 {strides = array<i32>} : memref<8x36xf32, #tpu.memory_space<vmem>>, vector<8x36xf32>,
    return
  }
}

module attributes {stable_mosaic.version = 11 : i64} {
  func.func @_wnconv_kernel(%arg0: i32, %arg1: i32, %arg2: memref<1x18x18x4xf32, #tpu.memory_space<vmem>>, %arg3: memref<9x4x128xf32, #tpu.memory_space<vmem>>, %arg4: memref<1x128xf32, #tpu.memory_space<vmem>>, %arg5: memref<1x128xf32, #tpu.memory_space<vmem>>, %arg6: memref<1x8x16x128xf32, #tpu.memory_space<vmem>>) attributes {dimension_semantics = [#tpu.dimension_semantics<parallel>, #tpu.dimension_semantics<parallel>], iteration_bounds = array<i64: 2, 2>, scalar_prefetch = 0 : i64, scratch_operands = 0 : i64, tpu.core_type = #tpu.core_type<tc>, window_params = [{transform_indices = @transform_0, window_bounds = array<i64: 1, 18, 18, 4>}, {pipeline_mode = #tpu.pipeline_mode<synchronous>, transform_indices = @transform_1, window_bounds = array<i64: 9, 4, 128>}, {pipeline_mode = #tpu.pipeline_mode<synchronous>, transform_indices = @transform_2, window_bounds = array<i64: 1, 128>}, {pipeline_mode = #tpu.pipeline_mode<synchronous>, transform_indices = @transform_3, window_bounds = array<i64: 1, 128>}, {transform_indices = @transform_4, window_bounds = array<i64: 1, 8, 16, 128>}]} {
    %c8_i32 = arith.constant 8 : i32
    %0 = arith.muli %arg1, %c8_i32 : i32
    %1 = tpu.assume_multiple %0, 8 : i32
    %c0_i32 = arith.constant 0 : i32
    %2 = arith.addi %1, %c0_i32 : i32
    %c0 = arith.constant 0 : index
    %3 = arith.index_cast %2 : i32 to index
    %c0_0 = arith.constant 0 : index
    %c0_1 = arith.constant 0 : index
    %4 = vector.load %arg2[%c0, %3, %c0_0, %c0_1] : memref<1x18x18x4xf32, #tpu.memory_space<vmem>>, vector<1x8x16x4xf32>
    %5 = vector.shape_cast %4 : vector<1x8x16x4xf32> to vector<8x16x4xf32>
    %6 = vector.shape_cast %5 : vector<8x16x4xf32> to vector<128x4xf32>
    %c0_i32_2 = arith.constant 0 : i32
    %7 = arith.addi %1, %c0_i32_2 : i32
    %c0_3 = arith.constant 0 : index
    %8 = arith.index_cast %7 : i32 to index
    %c1 = arith.constant 1 : index
    %c0_4 = arith.constant 0 : index
    %9 = vector.load %arg2[%c0_3, %8, %c1, %c0_4] : memref<1x18x18x4xf32, #tpu.memory_space<vmem>>, vector<1x8x16x4xf32>
    %10 = vector.shape_cast %9 : vector<1x8x16x4xf32> to vector<8x16x4xf32>
    %11 = vector.shape_cast %10 : vector<8x16x4xf32> to vector<128x4xf32>
    %c0_i32_5 = arith.constant 0 : i32
    %12 = arith.addi %1, %c0_i32_5 : i32
    %c0_6 = arith.constant 0 : index
    %13 = arith.index_cast %12 : i32 to index
    %c2 = arith.constant 2 : index
    %c0_7 = arith.constant 0 : index
    %14 = vector.load %arg2[%c0_6, %13, %c2, %c0_7] : memref<1x18x18x4xf32, #tpu.memory_space<vmem>>, vector<1x8x16x4xf32>
    %15 = vector.shape_cast %14 : vector<1x8x16x4xf32> to vector<8x16x4xf32>
    %16 = vector.shape_cast %15 : vector<8x16x4xf32> to vector<128x4xf32>
    %c1_i32 = arith.constant 1 : i32
    %17 = arith.addi %1, %c1_i32 : i32
    %c0_8 = arith.constant 0 : index
    %18 = arith.index_cast %17 : i32 to index
    %c0_9 = arith.constant 0 : index
    %c0_10 = arith.constant 0 : index
    %19 = vector.load %arg2[%c0_8, %18, %c0_9, %c0_10] : memref<1x18x18x4xf32, #tpu.memory_space<vmem>>, vector<1x8x16x4xf32>
    %20 = vector.shape_cast %19 : vector<1x8x16x4xf32> to vector<8x16x4xf32>
    %21 = vector.shape_cast %20 : vector<8x16x4xf32> to vector<128x4xf32>
    %c1_i32_11 = arith.constant 1 : i32
    %22 = arith.addi %1, %c1_i32_11 : i32
    %c0_12 = arith.constant 0 : index
    %23 = arith.index_cast %22 : i32 to index
    %c1_13 = arith.constant 1 : index
    %c0_14 = arith.constant 0 : index
    %24 = vector.load %arg2[%c0_12, %23, %c1_13, %c0_14] : memref<1x18x18x4xf32, #tpu.memory_space<vmem>>, vector<1x8x16x4xf32>
    %25 = vector.shape_cast %24 : vector<1x8x16x4xf32> to vector<8x16x4xf32>
    %26 = vector.shape_cast %25 : vector<8x16x4xf32> to vector<128x4xf32>
    %c1_i32_15 = arith.constant 1 : i32
    %27 = arith.addi %1, %c1_i32_15 : i32
    %c0_16 = arith.constant 0 : index
    %28 = arith.index_cast %27 : i32 to index
    %c2_17 = arith.constant 2 : index
    %c0_18 = arith.constant 0 : index
    %29 = vector.load %arg2[%c0_16, %28, %c2_17, %c0_18] : memref<1x18x18x4xf32, #tpu.memory_space<vmem>>, vector<1x8x16x4xf32>
    %30 = vector.shape_cast %29 : vector<1x8x16x4xf32> to vector<8x16x4xf32>
    %31 = vector.shape_cast %30 : vector<8x16x4xf32> to vector<128x4xf32>
    %c2_i32 = arith.constant 2 : i32
    %32 = arith.addi %1, %c2_i32 : i32
    %c0_19 = arith.constant 0 : index
    %33 = arith.index_cast %32 : i32 to index
    %c0_20 = arith.constant 0 : index
    %c0_21 = arith.constant 0 : index
    %34 = vector.load %arg2[%c0_19, %33, %c0_20, %c0_21] : memref<1x18x18x4xf32, #tpu.memory_space<vmem>>, vector<1x8x16x4xf32>
    %35 = vector.shape_cast %34 : vector<1x8x16x4xf32> to vector<8x16x4xf32>
    %36 = vector.shape_cast %35 : vector<8x16x4xf32> to vector<128x4xf32>
    %c2_i32_22 = arith.constant 2 : i32
    %37 = arith.addi %1, %c2_i32_22 : i32
    %c0_23 = arith.constant 0 : index
    %38 = arith.index_cast %37 : i32 to index
    %c1_24 = arith.constant 1 : index
    %c0_25 = arith.constant 0 : index
    %39 = vector.load %arg2[%c0_23, %38, %c1_24, %c0_25] : memref<1x18x18x4xf32, #tpu.memory_space<vmem>>, vector<1x8x16x4xf32>
    %40 = vector.shape_cast %39 : vector<1x8x16x4xf32> to vector<8x16x4xf32>
    %41 = vector.shape_cast %40 : vector<8x16x4xf32> to vector<128x4xf32>
    %c2_i32_26 = arith.constant 2 : i32
    %42 = arith.addi %1, %c2_i32_26 : i32
    %c0_27 = arith.constant 0 : index
    %43 = arith.index_cast %42 : i32 to index
    %c2_28 = arith.constant 2 : index
    %c0_29 = arith.constant 0 : index
    %44 = vector.load %arg2[%c0_27, %43, %c2_28, %c0_29] : memref<1x18x18x4xf32, #tpu.memory_space<vmem>>, vector<1x8x16x4xf32>
    %45 = vector.shape_cast %44 : vector<1x8x16x4xf32> to vector<8x16x4xf32>
    %46 = vector.shape_cast %45 : vector<8x16x4xf32> to vector<128x4xf32>
    %cst = arith.constant 0.000000e+00 : f32
    %47 = vector.broadcast %cst : f32 to vector<128x128xf32>
    %c0_30 = arith.constant 0 : index
    %c0_31 = arith.constant 0 : index
    %c0_32 = arith.constant 0 : index
    %48 = vector.load %arg3[%c0_30, %c0_31, %c0_32] : memref<9x4x128xf32, #tpu.memory_space<vmem>>, vector<1x4x128xf32>
    %49 = vector.shape_cast %48 : vector<1x4x128xf32> to vector<4x128xf32>
    %cst_33 = arith.constant dense<0.000000e+00> : vector<128x128xf32>
    %50 = tpu.matmul %6, %49, %cst_33 {dimension_numbers = #tpu.dot_dimension_numbers<[1], [0], [0], [1], [0, 0, 1, 1], [], []>} : vector<128x4xf32>, vector<4x128xf32>, vector<128x128xf32> -> vector<128x128xf32>
    %51 = arith.addf %47, %50 : vector<128x128xf32>
    %c1_34 = arith.constant 1 : index
    %c0_35 = arith.constant 0 : index
    %c0_36 = arith.constant 0 : index
    %52 = vector.load %arg3[%c1_34, %c0_35, %c0_36] : memref<9x4x128xf32, #tpu.memory_space<vmem>>, vector<1x4x128xf32>
    %53 = vector.shape_cast %52 : vector<1x4x128xf32> to vector<4x128xf32>
    %cst_37 = arith.constant dense<0.000000e+00> : vector<128x128xf32>
    %54 = tpu.matmul %11, %53, %cst_37 {dimension_numbers = #tpu.dot_dimension_numbers<[1], [0], [0], [1], [0, 0, 1, 1], [], []>} : vector<128x4xf32>, vector<4x128xf32>, vector<128x128xf32> -> vector<128x128xf32>
    %55 = arith.addf %51, %54 : vector<128x128xf32>
    %c2_38 = arith.constant 2 : index
    %c0_39 = arith.constant 0 : index
    %c0_40 = arith.constant 0 : index
    %56 = vector.load %arg3[%c2_38, %c0_39, %c0_40] : memref<9x4x128xf32, #tpu.memory_space<vmem>>, vector<1x4x128xf32>
    %57 = vector.shape_cast %56 : vector<1x4x128xf32> to vector<4x128xf32>
    %cst_41 = arith.constant dense<0.000000e+00> : vector<128x128xf32>
    %58 = tpu.matmul %16, %57, %cst_41 {dimension_numbers = #tpu.dot_dimension_numbers<[1], [0], [0], [1], [0, 0, 1, 1], [], []>} : vector<128x4xf32>, vector<4x128xf32>, vector<128x128xf32> -> vector<128x128xf32>
    %59 = arith.addf %55, %58 : vector<128x128xf32>
    %c3 = arith.constant 3 : index
    %c0_42 = arith.constant 0 : index
    %c0_43 = arith.constant 0 : index
    %60 = vector.load %arg3[%c3, %c0_42, %c0_43] : memref<9x4x128xf32, #tpu.memory_space<vmem>>, vector<1x4x128xf32>
    %61 = vector.shape_cast %60 : vector<1x4x128xf32> to vector<4x128xf32>
    %cst_44 = arith.constant dense<0.000000e+00> : vector<128x128xf32>
    %62 = tpu.matmul %21, %61, %cst_44 {dimension_numbers = #tpu.dot_dimension_numbers<[1], [0], [0], [1], [0, 0, 1, 1], [], []>} : vector<128x4xf32>, vector<4x128xf32>, vector<128x128xf32> -> vector<128x128xf32>
    %63 = arith.addf %59, %62 : vector<128x128xf32>
    %c4 = arith.constant 4 : index
    %c0_45 = arith.constant 0 : index
    %c0_46 = arith.constant 0 : index
    %64 = vector.load %arg3[%c4, %c0_45, %c0_46] : memref<9x4x128xf32, #tpu.memory_space<vmem>>, vector<1x4x128xf32>
    %65 = vector.shape_cast %64 : vector<1x4x128xf32> to vector<4x128xf32>
    %cst_47 = arith.constant dense<0.000000e+00> : vector<128x128xf32>
    %66 = tpu.matmul %26, %65, %cst_47 {dimension_numbers = #tpu.dot_dimension_numbers<[1], [0], [0], [1], [0, 0, 1, 1], [], []>} : vector<128x4xf32>, vector<4x128xf32>, vector<128x128xf32> -> vector<128x128xf32>
    %67 = arith.addf %63, %66 : vector<128x128xf32>
    %c5 = arith.constant 5 : index
    %c0_48 = arith.constant 0 : index
    %c0_49 = arith.constant 0 : index
    %68 = vector.load %arg3[%c5, %c0_48, %c0_49] : memref<9x4x128xf32, #tpu.memory_space<vmem>>, vector<1x4x128xf32>
    %69 = vector.shape_cast %68 : vector<1x4x128xf32> to vector<4x128xf32>
    %cst_50 = arith.constant dense<0.000000e+00> : vector<128x128xf32>
    %70 = tpu.matmul %31, %69, %cst_50 {dimension_numbers = #tpu.dot_dimension_numbers<[1], [0], [0], [1], [0, 0, 1, 1], [], []>} : vector<128x4xf32>, vector<4x128xf32>, vector<128x128xf32> -> vector<128x128xf32>
    %71 = arith.addf %67, %70 : vector<128x128xf32>
    %c6 = arith.constant 6 : index
    %c0_51 = arith.constant 0 : index
    %c0_52 = arith.constant 0 : index
    %72 = vector.load %arg3[%c6, %c0_51, %c0_52] : memref<9x4x128xf32, #tpu.memory_space<vmem>>, vector<1x4x128xf32>
    %73 = vector.shape_cast %72 : vector<1x4x128xf32> to vector<4x128xf32>
    %cst_53 = arith.constant dense<0.000000e+00> : vector<128x128xf32>
    %74 = tpu.matmul %36, %73, %cst_53 {dimension_numbers = #tpu.dot_dimension_numbers<[1], [0], [0], [1], [0, 0, 1, 1], [], []>} : vector<128x4xf32>, vector<4x128xf32>, vector<128x128xf32> -> vector<128x128xf32>
    %75 = arith.addf %71, %74 : vector<128x128xf32>
    %c7 = arith.constant 7 : index
    %c0_54 = arith.constant 0 : index
    %c0_55 = arith.constant 0 : index
    %76 = vector.load %arg3[%c7, %c0_54, %c0_55] : memref<9x4x128xf32, #tpu.memory_space<vmem>>, vector<1x4x128xf32>
    %77 = vector.shape_cast %76 : vector<1x4x128xf32> to vector<4x128xf32>
    %cst_56 = arith.constant dense<0.000000e+00> : vector<128x128xf32>
    %78 = tpu.matmul %41, %77, %cst_56 {dimension_numbers = #tpu.dot_dimension_numbers<[1], [0], [0], [1], [0, 0, 1, 1], [], []>} : vector<128x4xf32>, vector<4x128xf32>, vector<128x128xf32> -> vector<128x128xf32>
    %79 = arith.addf %75, %78 : vector<128x128xf32>
    %c8 = arith.constant 8 : index
    %c0_57 = arith.constant 0 : index
    %c0_58 = arith.constant 0 : index
    %80 = vector.load %arg3[%c8, %c0_57, %c0_58] : memref<9x4x128xf32, #tpu.memory_space<vmem>>, vector<1x4x128xf32>
    %81 = vector.shape_cast %80 : vector<1x4x128xf32> to vector<4x128xf32>
    %cst_59 = arith.constant dense<0.000000e+00> : vector<128x128xf32>
    %82 = tpu.matmul %46, %81, %cst_59 {dimension_numbers = #tpu.dot_dimension_numbers<[1], [0], [0], [1], [0, 0, 1, 1], [], []>} : vector<128x4xf32>, vector<4x128xf32>, vector<128x128xf32> -> vector<128x128xf32>
    %83 = arith.addf %79, %82 : vector<128x128xf32>
    %c0_60 = arith.constant 0 : index
    %c0_61 = arith.constant 0 : index
    %84 = vector.load %arg4[%c0_60, %c0_61] : memref<1x128xf32, #tpu.memory_space<vmem>>, vector<1x128xf32>
    %85 = vector.broadcast %84 : vector<1x128xf32> to vector<128x128xf32>
    %86 = arith.mulf %83, %85 : vector<128x128xf32>
    %c0_62 = arith.constant 0 : index
    %c0_63 = arith.constant 0 : index
    %87 = vector.load %arg5[%c0_62, %c0_63] : memref<1x128xf32, #tpu.memory_space<vmem>>, vector<1x128xf32>
    %88 = vector.broadcast %87 : vector<1x128xf32> to vector<128x128xf32>
    %89 = arith.addf %86, %88 : vector<128x128xf32>
    %90 = vector.shape_cast %89 : vector<128x128xf32> to vector<8x16x128xf32>
    %c0_64 = arith.constant 0 : index
    %c0_65 = arith.constant 0 : index
    %c0_66 = arith.constant 0 : index
    %c0_67 = arith.constant 0 : index
    %91 = vector.load %arg6[%c0_64, %c0_65, %c0_66, %c0_67] : memref<1x8x16x128xf32, #tpu.memory_space<vmem>>, vector<1x8x16x128xf32>
    %92 = vector.shape_cast %91 : vector<1x8x16x128xf32> to vector<8x16x128xf32>
    %93 = vector.shape_cast %90 : vector<8x16x128xf32> to vector<1x8x16x128xf32>
    tpu.vector_store %arg6[%c0_64, %c0_65, %c0_66, %c0_67], %93 {strides = array<i32>} : memref<1x8x16x128xf32, #tpu.memory_space<vmem>>, vector<1x8x16x128xf32>,
    return
  }
  func.func @transform_0(%arg0: i32, %arg1: i32) -> (i32, i32, i32, i32) {
    %c0_i32 = arith.constant 0 : i32
    %c0_i32_0 = arith.constant 0 : i32
    %c0_i32_1 = arith.constant 0 : i32
    %c0_i32_2 = arith.constant 0 : i32
    return %arg0, %c0_i32, %c0_i32_0, %c0_i32_1 : i32, i32, i32, i32
  }
  func.func @transform_1(%arg0: i32, %arg1: i32) -> (i32, i32, i32) {
    %c0_i32 = arith.constant 0 : i32
    %c0_i32_0 = arith.constant 0 : i32
    %c0_i32_1 = arith.constant 0 : i32
    %c0_i32_2 = arith.constant 0 : i32
    return %c0_i32, %c0_i32_0, %c0_i32_1 : i32, i32, i32
  }
  func.func @transform_2(%arg0: i32, %arg1: i32) -> (i32, i32) {
    %c0_i32 = arith.constant 0 : i32
    %c0_i32_0 = arith.constant 0 : i32
    %c0_i32_1 = arith.constant 0 : i32
    return %c0_i32, %c0_i32_0 : i32, i32
  }
  func.func @transform_3(%arg0: i32, %arg1: i32) -> (i32, i32) {
    %c0_i32 = arith.constant 0 : i32
    %c0_i32_0 = arith.constant 0 : i32
    %c0_i32_1 = arith.constant 0 : i32
    return %c0_i32, %c0_i32_0 : i32, i32
  }
  func.func @transform_4(%arg0: i32, %arg1: i32) -> (i32, i32, i32, i32) {
    %c0_i32 = arith.constant 0 : i32
    %c0_i32_0 = arith.constant 0 : i32
    %c0_i32_1 = arith.constant 0 : i32
    return %arg0, %arg1, %c0_i32, %c0_i32_0 : i32, i32, i32, i32
  }
}

</mosaic_0001>

<llo_original>
// kernel: tpu_custom_call.1
$region0: #{tpu_custom_call.1}
  #allocation0 [shape = 'u32[]', space=smem, size = 0x4, offset = 0x4, fixed_abs, tag = 'smem constant byte address 0x4 - core index']
  #allocation1 [shape = 'u32[72,128]{1,0:T(1,128)}', space=vmem, size = 0x9000, scoped, tag = 'internal scratch']
  %s0 = inlined_call_operand.vmem [shape: f32[9,8,4], index: 0, kind: input, shape index: {}]
  %s1 = inlined_call_operand.hbm [shape: f32[8,36], index: 1, kind: output, shape index: {}]
  %s2 = sld [smem:[#allocation0]]
  $region14: #{tpu_custom_call.1} parent=0
    _
  %s4 = ssub.s32 1, %s2
  %s5 = scalar_select 0, %s4, %s2
  $region1: #{tpu_custom_call.1} parent=0
    #allocation2 [shape = 'u8[4096]{0}', space=vmem, size = 0x1000, scoped, tag = 'output window, operand 0, single buffered']
    #allocation3 [shape = 's32[1]{0}', space=sflag, size = 0x4, scoped, tag = 'scoped memory for tpu_custom_call.1']
    %6 = vsyncpa [#allocation3], 0
    // Predicated region
    $region2: #{tpu_custom_call.1} parent=1 // pred_check
      _
    $region3: #{tpu_custom_call.1} parent=1 // pred_check_branch
      %8 = sbr.rel (0) target = $region5
    $region4: #{tpu_custom_call.1} parent=1 // pred_region
      _
    $region5: #{tpu_custom_call.1} parent=1 // pred_fallthru
      _
    %v9 = vld [vmem:[%s0] sm:$0xff]
    %s10 = scalar_lea.vmem %s0, 8
    %v11 = vld [vmem:[%s10] sm:$0xff]
    %s12 = scalar_lea.vmem %s0, 16
    %v13 = vld [vmem:[%s12] sm:$0xff]
    %s14 = scalar_lea.vmem %s0, 24
    %v15 = vld [vmem:[%s14] sm:$0xff]
    %s16 = scalar_lea.vmem %s0, 32
    %v17 = vld [vmem:[%s16] sm:$0xff]
    %s18 = scalar_lea.vmem %s0, 40
    %v19 = vld [vmem:[%s18] sm:$0xff]
    %s20 = scalar_lea.vmem %s0, 48
    %v21 = vld [vmem:[%s20] sm:$0xff]
    %s22 = scalar_lea.vmem %s0, 56
    %v23 = vld [vmem:[%s22] sm:$0xff]
    %s24 = scalar_lea.vmem %s0, 64
    %v25 = vld [vmem:[%s24] sm:$0xff]
    %27 = vrot.lane.b32.xlu0 %v11, 4
    %v28 = vpop.permute.xlu0 %27
    %31 = vrot.lane.b32.xlu0 %v13, 8
    %v32 = vpop.permute.xlu0 %31
    %35 = vrot.lane.b32.xlu0 %v15, 12
    %v36 = vpop.permute.xlu0 %35
    %39 = vrot.lane.b32.xlu0 %v17, 16
    %v40 = vpop.permute.xlu0 %39
    %43 = vrot.lane.b32.xlu0 %v19, 20
    %v44 = vpop.permute.xlu0 %43
    %47 = vrot.lane.b32.xlu0 %v21, 24
    %v48 = vpop.permute.xlu0 %47
    %51 = vrot.lane.b32.xlu0 %v23, 28
    %v52 = vpop.permute.xlu0 %51
    %55 = vrot.lane.b32.xlu0 %v25, 32
    %v56 = vpop.permute.xlu0 %55
    %vm58 = vcmask 31744
    %v59 = vsel %vm58, %v9, %v28
    %vm60 = vcmask 64512
    %v61 = vsel %vm60, %v59, %v32
    %vm62 = vcmask 97280
    %v63 = vsel %vm62, %v61, %v36
    %vm64 = vcmask 130048
    %v65 = vsel %vm64, %v63, %v40
    %vm66 = vcmask 162816
    %v67 = vsel %vm66, %v65, %v44
    %vm68 = vcmask 195584
    %v69 = vsel %vm68, %v67, %v48
    %vm70 = vcmask 228352
    %v71 = vsel %vm70, %v69, %v52
    %vm72 = vcmask 261120
    %v73 = vsel %vm72, %v71, %v56
    %vm74 = vcmask 293888
    %75 = vst.msk [vmem:[#allocation2] sm:$0xff] %vm74, %v73
    // Predicated region
    $region6: #{tpu_custom_call.1} parent=1 // pred_check
      _
    $region7: #{tpu_custom_call.1} parent=1 // pred_check_branch
      %77 = sbr.rel (0) target = $region9
    $region8: #{tpu_custom_call.1} parent=1 // pred_region
      %79 = vsyncadd [#allocation3], 0
      %s81 = sshll.u32 [#allocation2], 4
      %s82 = int_to_ptr.vmem [resolvable:$true] %s81
      %s83 = sshll.u32 %s1, 4
      %s84 = int_to_ptr.hbm [resolvable:$true] %s83
      %86 = dma.vmem_to_hbm [thread:$0]  %s82, 128, %s84, [#allocation3]
    $region9: #{tpu_custom_call.1} parent=1 // pred_fallthru
      _
    // Predicated region
    $region10: #{tpu_custom_call.1} parent=1 // pred_check
      _
    $region11: #{tpu_custom_call.1} parent=1 // pred_check_branch
      %88 = sbr.rel (0) target = $region13
    $region12: #{tpu_custom_call.1} parent=1 // pred_region
      %90 = dma.done [#allocation3], 128
    $region13: #{tpu_custom_call.1} parent=1 // pred_fallthru
      _
    %91 = vsyncpa [#allocation3], 1

// kernel: _wn_conv2d_impl.1
$region0: #{_wn_conv2d_impl.1}
  #allocation0 [shape = 'u32[]', space=smem, size = 0x4, offset = 0x4, fixed_abs, tag = 'smem constant byte address 0x4 - core index']
  #allocation1 [shape = 'u32[72,128]{1,0:T(1,128)}', space=vmem, size = 0x9000, scoped, tag = 'internal scratch']
  %s0 = inlined_call_operand.vmem [shape: f32[2,18,18,4], index: 0, kind: input, shape index: {}]
  %s1 = inlined_call_operand.vmem [shape: f32[9,4,128], index: 1, kind: input, shape index: {}]
  %s2 = inlined_call_operand.vmem [shape: f32[1,128], index: 2, kind: input, shape index: {}]
  %s3 = inlined_call_operand.vmem [shape: f32[1,128], index: 3, kind: input, shape index: {}]
  %s4 = inlined_call_operand.vmem [shape: f32[2,16,16,128], index: 4, kind: output, shape index: {}]
  %s5 = sld [smem:[#allocation0]]
  $region49: #{_wn_conv2d_impl.1} parent=0
    _
  %s7 = ssub.s32 1, %s5
  %s8 = scalar_select 0, %s7, %s5
  loop: start=0, step=1, limit=6
  $region2: #{_wn_conv2d_impl.1} parent=0 // loop_pre_header
    _
  $region3: #{_wn_conv2d_impl.1} parent=0 // loop_header
    %s10 = sphi 0, %s14
    %p11 = scmp.ge.s32.totalorder %s10, 6
    %s17 = sphi 0, %s29
    %s18 = sphi 0, %s25
    %s19 = sphi 0, %s17
    %s20 = sphi 0, %s18
    %s21 = sphi 0, %s19
    %s22 = sphi 0, %s20
    %s32 = sphi 0, %s34
    %s35 = sphi 0, %s32
    %s36 = sphi 0, %s35
    %s52 = sphi 0, %s36
    %s56 = sphi 0, %s56
    %s58 = sphi 0, %s56
    %s59 = sphi 0, %s58
    %s73 = sphi 0, %s59
    %s77 = sphi 0, %s77
    %s79 = sphi 0, %s77
    %s80 = sphi 0, %s79
    %s94 = sphi 0, %s80
    %s98 = sphi 0, %s98
    %s100 = sphi 0, %s98
    %s101 = sphi 0, %s100
    %s115 = sphi 0, %s101
    %s123 = sphi 0, %s125
    %s126 = sphi 0, %s123
    %s127 = sphi 0, %s126
    %s143 = sphi 0, %s127
  $region4: #{_wn_conv2d_impl.1} parent=0 // loop_header_branch
    %13 = sbr.rel (%p11) target = $region8
  $region5: #{_wn_conv2d_impl.1} parent=0 // loop_body
    %s15 = ssub.s32 %s10, 1
    %s16 = ssub.s32 %s10, 2
    %s23 = sadd.s32 1, %s18
    %p24 = scmp.ge.s32.totalorder %s23, 2
    %s25 = scalar_select %p24, 0, %s23
    %s26 = sadd.s32 1, %s17
    %s27 = scalar_select %p24, %s26, %s17
    %p28 = scmp.ge.s32.totalorder %s27, 2
    %s29 = scalar_select %p28, 0, %s27
    %s30 = ssub.s32 %s17, %s29
    %p31 = scmp.eq.s32.totalorder %s30, 0
    %s33 = sadd.s32 %s32, 1
    %s34 = scalar_select %p31, %s32, %s33
    %p37 = pneg %p31
    %p38 = scmp.eq.s32.totalorder %s10, 3
    %p39 = por %p37, %p38
    %p40 = scmp.ne.s32.totalorder %s32, %s35
    %p41 = scmp.eq.s32.totalorder %s10, 0
    %p42 = por %p40, %p41
    %p43 = scmp.ne.s32.totalorder %s32, %s35
    %p44 = scmp.eq.s32.totalorder %s15, 3
    %p45 = por %p43, %p44
    %p46 = scmp.ne.s32.totalorder %s35, %s36
    %p47 = scmp.eq.s32.totalorder %s15, 0
    %p48 = por %p46, %p47
    %p49 = scmp.ne.s32.totalorder %s35, %s36
    %p50 = scmp.eq.s32.totalorder %s16, 3
    %p51 = por %p49, %p50
    %p53 = scmp.ne.s32.totalorder %s36, %s52
    %p54 = scmp.eq.s32.totalorder %s16, 0
    %p55 = por %p53, %p54
    %s57 = sadd.s32 %s56, 1
    %p60 = scmp.eq.s32.totalorder %s10, 3
    %p61 = scmp.ne.s32.totalorder %s56, %s58
    %p62 = scmp.eq.s32.totalorder %s10, 0
    %p63 = por %p61, %p62
    %p64 = scmp.ne.s32.totalorder %s56, %s58
    %p65 = scmp.eq.s32.totalorder %s15, 3
    %p66 = por %p64, %p65
    %p67 = scmp.ne.s32.totalorder %s58, %s59
    %p68 = scmp.eq.s32.totalorder %s15, 0
    %p69 = por %p67, %p68
    %p70 = scmp.ne.s32.totalorder %s58, %s59
    %p71 = scmp.eq.s32.totalorder %s16, 3
    %p72 = por %p70, %p71
    %p74 = scmp.ne.s32.totalorder %s59, %s73
    %p75 = scmp.eq.s32.totalorder %s16, 0
    %p76 = por %p74, %p75
    %s78 = sadd.s32 %s77, 1
    %p81 = scmp.eq.s32.totalorder %s10, 3
    %p82 = scmp.ne.s32.totalorder %s77, %s79
    %p83 = scmp.eq.s32.totalorder %s10, 0
    %p84 = por %p82, %p83
    %p85 = scmp.ne.s32.totalorder %s77, %s79
    %p86 = scmp.eq.s32.totalorder %s15, 3
    %p87 = por %p85, %p86
    %p88 = scmp.ne.s32.totalorder %s79, %s80
    %p89 = scmp.eq.s32.totalorder %s15, 0
    %p90 = por %p88, %p89
    %p91 = scmp.ne.s32.totalorder %s79, %s80
    %p92 = scmp.eq.s32.totalorder %s16, 3
    %p93 = por %p91, %p92
    %p95 = scmp.ne.s32.totalorder %s80, %s94
    %p96 = scmp.eq.s32.totalorder %s16, 0
    %p97 = por %p95, %p96
    %s99 = sadd.s32 %s98, 1
    %p102 = scmp.eq.s32.totalorder %s10, 3
    %p103 = scmp.ne.s32.totalorder %s98, %s100
    %p104 = scmp.eq.s32.totalorder %s10, 0
    %p105 = por %p103, %p104
    %p106 = scmp.ne.s32.totalorder %s98, %s100
    %p107 = scmp.eq.s32.totalorder %s15, 3
    %p108 = por %p106, %p107
    %p109 = scmp.ne.s32.totalorder %s100, %s101
    %p110 = scmp.eq.s32.totalorder %s15, 0
    %p111 = por %p109, %p110
    %p112 = scmp.ne.s32.totalorder %s100, %s101
    %p113 = scmp.eq.s32.totalorder %s16, 3
    %p114 = por %p112, %p113
    %p116 = scmp.ne.s32.totalorder %s101, %s115
    %p117 = scmp.eq.s32.totalorder %s16, 0
    %p118 = por %p116, %p117
    %s119 = ssub.s32 %s17, %s29
    %s120 = ssub.s32 %s18, %s25
    %s121 = sor.u32 %s119, %s120
    %p122 = scmp.eq.s32.totalorder %s121, 0
    %s124 = sadd.s32 %s123, 1
    %s125 = scalar_select %p122, %s123, %s124
    %p128 = pneg %p122
    %p129 = scmp.eq.s32.totalorder %s10, 3
    %p130 = por %p128, %p129
    %p131 = scmp.ne.s32.totalorder %s123, %s126
    %p132 = scmp.eq.s32.totalorder %s10, 0
    %p133 = por %p131, %p132
    %p134 = scmp.ne.s32.totalorder %s123, %s126
    %p135 = scmp.eq.s32.totalorder %s15, 3
    %p136 = por %p134, %p135
    %p137 = scmp.ne.s32.totalorder %s126, %s127
    %p138 = scmp.eq.s32.totalorder %s15, 0
    %p139 = por %p137, %p138
    %p140 = scmp.ne.s32.totalorder %s126, %s127
    %p141 = scmp.eq.s32.totalorder %s16, 3
    %p142 = por %p140, %p141
    %p144 = scmp.ne.s32.totalorder %s127, %s143
    %p145 = scmp.eq.s32.totalorder %s16, 0
    %p146 = por %p144, %p145
    %p147 = scmp.le.s32.totalorder 1, %s10
    %p148 = scmp.lt.s32.totalorder %s10, 5
    %p149 = pnand %p147, %p148
    %p150 = pneg %p149
    // Predicated region
    $region9: #{_wn_conv2d_impl.1} parent=5 // pred_check
      _
    $region10: #{_wn_conv2d_impl.1} parent=5 // pred_check_branch
      %152 = sbr.rel (%p149) target = $region12
    $region11: #{_wn_conv2d_impl.1} parent=5 // pred_region
      %s153 = ssub.s32 %s10, 1
      // Predicated region
      $region13: #{_wn_conv2d_impl.1} parent=11 // pred_check
        %p154 = pneg %p69
      $region14: #{_wn_conv2d_impl.1} parent=11 // pred_check_branch
        %156 = sbr.rel (%p154) target = $region16
      $region15: #{_wn_conv2d_impl.1} parent=11 // pred_region
        _
      $region16: #{_wn_conv2d_impl.1} parent=11 // pred_fallthru
        _
      // Predicated region
      $region17: #{_wn_conv2d_impl.1} parent=11 // pred_check
        %p157 = pneg %p90
      $region18: #{_wn_conv2d_impl.1} parent=11 // pred_check_branch
        %159 = sbr.rel (%p157) target = $region20
      $region19: #{_wn_conv2d_impl.1} parent=11 // pred_region
        _
      $region20: #{_wn_conv2d_impl.1} parent=11 // pred_fallthru
        _
      // Predicated region
      $region21: #{_wn_conv2d_impl.1} parent=11 // pred_check
        %p160 = pneg %p111
      $region22: #{_wn_conv2d_impl.1} parent=11 // pred_check_branch
        %162 = sbr.rel (%p160) target = $region24
      $region23: #{_wn_conv2d_impl.1} parent=11 // pred_region
        _
      $region24: #{_wn_conv2d_impl.1} parent=11 // pred_fallthru
        _
    $region12: #{_wn_conv2d_impl.1} parent=5 // pred_fallthru
      _
    %p163 = scmp.lt.s32.totalorder %s10, 4
    // Predicated region
    $region25: #{_wn_conv2d_impl.1} parent=5 // pred_check
      %p164 = pneg %p163
    $region26: #{_wn_conv2d_impl.1} parent=5 // pred_check_branch
      %166 = sbr.rel (%p164) target = $region28
    $region27: #{_wn_conv2d_impl.1} parent=5 // pred_region
      // Predicated region
      $region29: #{_wn_conv2d_impl.1} parent=27 // pred_check
        %p167 = pneg %p42
      $region30: #{_wn_conv2d_impl.1} parent=27 // pred_check_branch
        %169 = sbr.rel (%p167) target = $region32
      $region31: #{_wn_conv2d_impl.1} parent=27 // pred_region
        %p170 = scmp.lt.s32.totalorder %s17, 1
        %s171 = scalar_select %p170, %s17, 1
        %s172 = smul.addr %s171, 54
        %s173 = smul.addr %s172, 8
        %s174 = scalar_lea.vmem %s0, %s173
      $region32: #{_wn_conv2d_impl.1} parent=27 // pred_fallthru
        _
    $region28: #{_wn_conv2d_impl.1} parent=5 // pred_fallthru
      _
    %p175 = scmp.le.s32.totalorder 1, %s10
    %p176 = scmp.lt.s32.totalorder %s10, 5
    %p177 = pnand %p175, %p176
    %p178 = pneg %p177
    // Predicated region
    $region33: #{_wn_conv2d_impl.1} parent=5 // pred_check
      _
    $region34: #{_wn_conv2d_impl.1} parent=5 // pred_check_branch
      %180 = sbr.rel (%p177) target = $region36
    $region35: #{_wn_conv2d_impl.1} parent=5 // pred_region
      %s181 = ssub.s32 %s10, 1
      %p182 = scmp.lt.s32.totalorder %s19, 1
      %s183 = scalar_select %p182, %s19, 1
      %s184 = smul.addr %s183, 54
      %s185 = smul.addr %s184, 8
      %s186 = scalar_lea.vmem %s0, %s185
      %p187 = pneg %p48
      %p188 = pneg %p45
      %p189 = pneg %p69
      %p190 = pneg %p66
      %p191 = pneg %p90
      %p192 = pneg %p87
      %p193 = pneg %p111
      %p194 = pneg %p108
      %p195 = pneg %p139
      %p196 = pneg %p136
      %s197 = smul.u32 8, %s20
      %p198 = scmp.lt.s32.totalorder %s19, 1
      %s199 = scalar_select %p198, %s19, 1
      %p200 = scmp.lt.s32.totalorder %s197, 15
      %s201 = scalar_select %p200, %s197, 15
      %s202 = smul.addr %s201, 2
      %s203 = smul.addr %s199, 32
      %s204 = sadd.s32 %s202, %s203
      %s205 = smul.addr %s204, 8
      %s206 = scalar_lea.vmem %s4, %s205
      %p207 = scmp.lt.s32.totalorder %s19, 1
      %s208 = scalar_select %p207, %s19, 1
      %s209 = smul.addr %s208, 54
      %s210 = smul.addr %s209, 8
      %s211 = scalar_lea.vmem %s0, %s210
      %s212 = smul.u32 8, %s20
      %p213 = scmp.lt.s32.totalorder %s19, 1
      %s214 = scalar_select %p213, %s19, 1
      %p215 = scmp.lt.s32.totalorder %s212, 15
      %s216 = scalar_select %p215, %s212, 15
      %s217 = smul.addr %s216, 2
      %s218 = smul.addr %s214, 32
      %s219 = sadd.s32 %s217, %s218
      %s220 = smul.addr %s219, 8
      %s221 = scalar_lea.vmem %s4, %s220
      %s222 = smul.u32 8, %s20
      %s223 = smul.u32 %s20, 8
      %s224 = smul.u32 %s223, 24
      %s225 = scalar_lea.vmem %s211, %s224
      %v226 = vld [vmem:[%s225] sm:$0xff]
      %v227 = vld [vmem:[%s225 + $0x8] sm:$0xff]
      %v228 = vld [vmem:[%s225 + $0x18] sm:$0xff]
      %v229 = vld [vmem:[%s225 + $0x20] sm:$0xff]
      %v230 = vld [vmem:[%s225 + $0x30] sm:$0xff]
      %v231 = vld [vmem:[%s225 + $0x38] sm:$0xff]
      %v232 = vld [vmem:[%s225 + $0x48] sm:$0xff]
      %v233 = vld [vmem:[%s225 + $0x50] sm:$0xff]
      %v234 = vld [vmem:[%s225 + $0x60] sm:$0xff]
      %v235 = vld [vmem:[%s225 + $0x68] sm:$0xff]
      %v236 = vld [vmem:[%s225 + $0x78] sm:$0xff]
      %v237 = vld [vmem:[%s225 + $0x80] sm:$0xff]
      %v238 = vld [vmem:[%s225 + $0x90] sm:$0xff]
      %v239 = vld [vmem:[%s225 + $0x98] sm:$0xff]
      %v240 = vld [vmem:[%s225 + $0xa8] sm:$0xff]
      %v241 = vld [vmem:[%s225 + $0xb0] sm:$0xff]
      %v242 = vld [vmem:[%s225 + $0x1] sm:$0xff]
      %v243 = vld [vmem:[%s225 + $0x9] sm:$0xff]
      %v244 = vld [vmem:[%s225 + $0x19] sm:$0xff]
      %v245 = vld [vmem:[%s225 + $0x21] sm:$0xff]
      %v246 = vld [vmem:[%s225 + $0x31] sm:$0xff]
      %v247 = vld [vmem:[%s225 + $0x39] sm:$0xff]
      %v248 = vld [vmem:[%s225 + $0x49] sm:$0xff]
      %v249 = vld [vmem:[%s225 + $0x51] sm:$0xff]
      %v250 = vld [vmem:[%s225 + $0x61] sm:$0xff]
      %v251 = vld [vmem:[%s225 + $0x69] sm:$0xff]
      %v252 = vld [vmem:[%s225 + $0x79] sm:$0xff]
      %v253 = vld [vmem:[%s225 + $0x81] sm:$0xff]
      %v254 = vld [vmem:[%s225 + $0x91] sm:$0xff]
      %v255 = vld [vmem:[%s225 + $0x99] sm:$0xff]
      %v256 = vld [vmem:[%s225 + $0xa9] sm:$0xff]
      %v257 = vld [vmem:[%s225 + $0xb1] sm:$0xff]
      %v258 = vld [vmem:[%s225 + $0x2] sm:$0xff]
      %v259 = vld [vmem:[%s225 + $0xa] sm:$0xff]
      %v260 = vld [vmem:[%s225 + $0x1a] sm:$0xff]
      %v261 = vld [vmem:[%s225 + $0x22] sm:$0xff]
      %v262 = vld [vmem:[%s225 + $0x32] sm:$0xff]
      %v263 = vld [vmem:[%s225 + $0x3a] sm:$0xff]
      %v264 = vld [vmem:[%s225 + $0x4a] sm:$0xff]
      %v265 = vld [vmem:[%s225 + $0x52] sm:$0xff]
      %v266 = vld [vmem:[%s225 + $0x62] sm:$0xff]
      %v267 = vld [vmem:[%s225 + $0x6a] sm:$0xff]
      %v268 = vld [vmem:[%s225 + $0x7a] sm:$0xff]
      %v269 = vld [vmem:[%s225 + $0x82] sm:$0xff]
      %v270 = vld [vmem:[%s225 + $0x92] sm:$0xff]
      %v271 = vld [vmem:[%s225 + $0x9a] sm:$0xff]
      %v272 = vld [vmem:[%s225 + $0xaa] sm:$0xff]
      %v273 = vld [vmem:[%s225 + $0xb2] sm:$0xff]
      %s274 = sadd.s32 %s223, 1
      %s275 = smul.u32 %s274, 24
      %s276 = scalar_lea.vmem %s211, %s275
      %v277 = vld [vmem:[%s276] sm:$0xff]
      %v278 = vld [vmem:[%s276 + $0x8] sm:$0xff]
      %v279 = vld [vmem:[%s276 + $0x18] sm:$0xff]
      %v280 = vld [vmem:[%s276 + $0x20] sm:$0xff]
      %v281 = vld [vmem:[%s276 + $0x30] sm:$0xff]
      %v282 = vld [vmem:[%s276 + $0x38] sm:$0xff]
      %v283 = vld [vmem:[%s276 + $0x48] sm:$0xff]
      %v284 = vld [vmem:[%s276 + $0x50] sm:$0xff]
      %v285 = vld [vmem:[%s276 + $0x60] sm:$0xff]
      %v286 = vld [vmem:[%s276 + $0x68] sm:$0xff]
      %v287 = vld [vmem:[%s276 + $0x78] sm:$0xff]
      %v288 = vld [vmem:[%s276 + $0x80] sm:$0xff]
      %v289 = vld [vmem:[%s276 + $0x90] sm:$0xff]
      %v290 = vld [vmem:[%s276 + $0x98] sm:$0xff]
      %v291 = vld [vmem:[%s276 + $0xa8] sm:$0xff]
      %v292 = vld [vmem:[%s276 + $0xb0] sm:$0xff]
      %v293 = vld [vmem:[%s276 + $0x1] sm:$0xff]
      %v294 = vld [vmem:[%s276 + $0x9] sm:$0xff]
      %v295 = vld [vmem:[%s276 + $0x19] sm:$0xff]
      %v296 = vld [vmem:[%s276 + $0x21] sm:$0xff]
      %v297 = vld [vmem:[%s276 + $0x31] sm:$0xff]
      %v298 = vld [vmem:[%s276 + $0x39] sm:$0xff]
      %v299 = vld [vmem:[%s276 + $0x49] sm:$0xff]
      %v300 = vld [vmem:[%s276 + $0x51] sm:$0xff]
      %v301 = vld [vmem:[%s276 + $0x61] sm:$0xff]
      %v302 = vld [vmem:[%s276 + $0x69] sm:$0xff]
      %v303 = vld [vmem:[%s276 + $0x79] sm:$0xff]
      %v304 = vld [vmem:[%s276 + $0x81] sm:$0xff]
      %v305 = vld [vmem:[%s276 + $0x91] sm:$0xff]
      %v306 = vld [vmem:[%s276 + $0x99] sm:$0xff]
      %v307 = vld [vmem:[%s276 + $0xa9] sm:$0xff]
      %v308 = vld [vmem:[%s276 + $0xb1] sm:$0xff]
      %v309 = vld [vmem:[%s276 + $0x2] sm:$0xff]
      %v310 = vld [vmem:[%s276 + $0xa] sm:$0xff]
      %v311 = vld [vmem:[%s276 + $0x1a] sm:$0xff]
      %v312 = vld [vmem:[%s276 + $0x22] sm:$0xff]
      %v313 = vld [vmem:[%s276 + $0x32] sm:$0xff]
      %v314 = vld [vmem:[%s276 + $0x3a] sm:$0xff]
      %v315 = vld [vmem:[%s276 + $0x4a] sm:$0xff]
      %v316 = vld [vmem:[%s276 + $0x52] sm:$0xff]
      %v317 = vld [vmem:[%s276 + $0x62] sm:$0xff]
      %v318 = vld [vmem:[%s276 + $0x6a] sm:$0xff]
      %v319 = vld [vmem:[%s276 + $0x7a] sm:$0xff]
      %v320 = vld [vmem:[%s276 + $0x82] sm:$0xff]
      %v321 = vld [vmem:[%s276 + $0x92] sm:$0xff]
      %v322 = vld [vmem:[%s276 + $0x9a] sm:$0xff]
      %v323 = vld [vmem:[%s276 + $0xaa] sm:$0xff]
      %v324 = vld [vmem:[%s276 + $0xb2] sm:$0xff]
      %s325 = sadd.s32 %s223, 2
      %s326 = smul.u32 %s325, 24
      %s327 = scalar_lea.vmem %s211, %s326
      %v328 = vld [vmem:[%s327] sm:$0xff]
      %v329 = vld [vmem:[%s327 + $0x8] sm:$0xff]
      %v330 = vld [vmem:[%s327 + $0x18] sm:$0xff]
      %v331 = vld [vmem:[%s327 + $0x20] sm:$0xff]
      %v332 = vld [vmem:[%s327 + $0x30] sm:$0xff]
      %v333 = vld [vmem:[%s327 + $0x38] sm:$0xff]
      %v334 = vld [vmem:[%s327 + $0x48] sm:$0xff]
      %v335 = vld [vmem:[%s327 + $0x50] sm:$0xff]
      %v336 = vld [vmem:[%s327 + $0x60] sm:$0xff]
      %v337 = vld [vmem:[%s327 + $0x68] sm:$0xff]
      %v338 = vld [vmem:[%s327 + $0x78] sm:$0xff]
      %v339 = vld [vmem:[%s327 + $0x80] sm:$0xff]
      %v340 = vld [vmem:[%s327 + $0x90] sm:$0xff]
      %v341 = vld [vmem:[%s327 + $0x98] sm:$0xff]
      %v342 = vld [vmem:[%s327 + $0xa8] sm:$0xff]
      %v343 = vld [vmem:[%s327 + $0xb0] sm:$0xff]
      %v344 = vld [vmem:[%s327 + $0x1] sm:$0xff]
      %v345 = vld [vmem:[%s327 + $0x9] sm:$0xff]
      %v346 = vld [vmem:[%s327 + $0x19] sm:$0xff]
      %v347 = vld [vmem:[%s327 + $0x21] sm:$0xff]
      %v348 = vld [vmem:[%s327 + $0x31] sm:$0xff]
      %v349 = vld [vmem:[%s327 + $0x39] sm:$0xff]
      %v350 = vld [vmem:[%s327 + $0x49] sm:$0xff]
      %v351 = vld [vmem:[%s327 + $0x51] sm:$0xff]
      %v352 = vld [vmem:[%s327 + $0x61] sm:$0xff]
      %v353 = vld [vmem:[%s327 + $0x69] sm:$0xff]
      %v354 = vld [vmem:[%s327 + $0x79] sm:$0xff]
      %v355 = vld [vmem:[%s327 + $0x81] sm:$0xff]
      %v356 = vld [vmem:[%s327 + $0x91] sm:$0xff]
      %v357 = vld [vmem:[%s327 + $0x99] sm:$0xff]
      %v358 = vld [vmem:[%s327 + $0xa9] sm:$0xff]
      %v359 = vld [vmem:[%s327 + $0xb1] sm:$0xff]
      %v360 = vld [vmem:[%s327 + $0x2] sm:$0xff]
      %v361 = vld [vmem:[%s327 + $0xa] sm:$0xff]
      %v362 = vld [vmem:[%s327 + $0x1a] sm:$0xff]
      %v363 = vld [vmem:[%s327 + $0x22] sm:$0xff]
      %v364 = vld [vmem:[%s327 + $0x32] sm:$0xff]
      %v365 = vld [vmem:[%s327 + $0x3a] sm:$0xff]
      %v366 = vld [vmem:[%s327 + $0x4a] sm:$0xff]
      %v367 = vld [vmem:[%s327 + $0x52] sm:$0xff]
      %v368 = vld [vmem:[%s327 + $0x62] sm:$0xff]
      %v369 = vld [vmem:[%s327 + $0x6a] sm:$0xff]
      %v370 = vld [vmem:[%s327 + $0x7a] sm:$0xff]
      %v371 = vld [vmem:[%s327 + $0x82] sm:$0xff]
      %v372 = vld [vmem:[%s327 + $0x92] sm:$0xff]
      %v373 = vld [vmem:[%s327 + $0x9a] sm:$0xff]
      %v374 = vld [vmem:[%s327 + $0xaa] sm:$0xff]
      %v375 = vld [vmem:[%s327 + $0xb2] sm:$0xff]
      %v376 = vld [vmem:[%s1] sm:$0xf]
      %s377 = scalar_lea.vmem %s1, 4
      %v378 = vld [vmem:[%s377] sm:$0xf]
      %vm379 = vcmask 31744
      %v381 = vsel %vm379, %v242, 0
      %v384 = vsel %vm379, %v243, 0
      %v387 = vsel %vm379, %v244, 0
      %v390 = vsel %vm379, %v245, 0
      %v393 = vsel %vm379, %v246, 0
      %v396 = vsel %vm379, %v247, 0
      %v399 = vsel %vm379, %v248, 0
      %v402 = vsel %vm379, %v249, 0
      %v405 = vsel %vm379, %v250, 0
      %v408 = vsel %vm379, %v251, 0
      %v411 = vsel %vm379, %v252, 0
      %v414 = vsel %vm379, %v253, 0
      %v417 = vsel %vm379, %v254, 0
      %v420 = vsel %vm379, %v255, 0
      %v423 = vsel %vm379, %v256, 0
      %v426 = vsel %vm379, %v257, 0
      %vm428 = vcmask 1043456
      %v430 = vsel %vm428, %v378, 0
      %432 = vmatpush.msra.mxu0 0.0
      %433 = vmatpush.msra.mxu0 0.0
      %434 = vmatpush.msra.mxu0 0.0
      %435 = vmatpush.msra.mxu0 0.0
      %436 = vmatpush.msra.mxu0 0.0
      %437 = vmatpush.msra.mxu0 0.0
      %438 = vmatpush.msra.mxu0 0.0
      %439 = vmatpush.msra.mxu0 0.0
      %440 = vmatpush.msra.mxu0 0.0
      %441 = vmatpush.msra.mxu0 0.0
      %442 = vmatpush.msra.mxu0 0.0
      %443 = vmatpush.msra.mxu0 0.0
      %444 = vmatpush.msra.mxu0 0.0
      %445 = vmatpush.msra.mxu0 0.0
      %446 = vmatpush.msra.mxu0 0.0
      %447 = vmatpush.msra.mxu0 %v430
      %448 = vmatmul.f32.gmra.mxu0 %v381
      %v449 = vpop.f32.mrf.mxu0
      %v450 = vadd.f32 0.0, %v449
      %451 = vmatmul.f32.gmra.mxu0 %v384
      %v452 = vpop.f32.mrf.mxu0
      %v453 = vadd.f32 0.0, %v452
      %454 = vmatmul.f32.gmra.mxu0 %v387
      %v455 = vpop.f32.mrf.mxu0
      %v456 = vadd.f32 0.0, %v455
      %457 = vmatmul.f32.gmra.mxu0 %v390
      %v458 = vpop.f32.mrf.mxu0
      %v459 = vadd.f32 0.0, %v458
      %460 = vmatmul.f32.gmra.mxu0 %v393
      %v461 = vpop.f32.mrf.mxu0
      %v462 = vadd.f32 0.0, %v461
      %463 = vmatmul.f32.gmra.mxu0 %v396
      %v464 = vpop.f32.mrf.mxu0
      %v465 = vadd.f32 0.0, %v464
      %466 = vmatmul.f32.gmra.mxu0 %v399
      %v467 = vpop.f32.mrf.mxu0
      %v468 = vadd.f32 0.0, %v467
      %469 = vmatmul.f32.gmra.mxu0 %v402
      %v470 = vpop.f32.mrf.mxu0
      %v471 = vadd.f32 0.0, %v470
      %472 = vmatmul.f32.gmra.mxu0 %v405
      %v473 = vpop.f32.mrf.mxu0
      %v474 = vadd.f32 0.0, %v473
      %475 = vmatmul.f32.gmra.mxu0 %v408
      %v476 = vpop.f32.mrf.mxu0
      %v477 = vadd.f32 0.0, %v476
      %478 = vmatmul.f32.gmra.mxu0 %v411
      %v479 = vpop.f32.mrf.mxu0
      %v480 = vadd.f32 0.0, %v479
      %481 = vmatmul.f32.gmra.mxu0 %v414
      %v482 = vpop.f32.mrf.mxu0
      %v483 = vadd.f32 0.0, %v482
      %484 = vmatmul.f32.gmra.mxu0 %v417
      %v485 = vpop.f32.mrf.mxu0
      %v486 = vadd.f32 0.0, %v485
      %487 = vmatmul.f32.gmra.mxu0 %v420
      %v488 = vpop.f32.mrf.mxu0
      %v489 = vadd.f32 0.0, %v488
      %490 = vmatmul.f32.gmra.mxu0 %v423
      %v491 = vpop.f32.mrf.mxu0
      %v492 = vadd.f32 0.0, %v491
      %493 = vmatmul.f32.gmra.mxu0 %v426
      %v494 = vpop.f32.mrf.mxu0
      %v495 = vadd.f32 0.0, %v494
      %496 = vdwg.mxu0
      %v498 = vsel %vm379, %v226, 0
      %v501 = vsel %vm379, %v227, 0
      %v504 = vsel %vm379, %v228, 0
      %v507 = vsel %vm379, %v229, 0
      %v510 = vsel %vm379, %v230, 0
      %v513 = vsel %vm379, %v231, 0
      %v516 = vsel %vm379, %v232, 0
      %v519 = vsel %vm379, %v233, 0
      %v522 = vsel %vm379, %v234, 0
      %v525 = vsel %vm379, %v235, 0
      %v528 = vsel %vm379, %v236, 0
      %v531 = vsel %vm379, %v237, 0
      %v534 = vsel %vm379, %v238, 0
      %v537 = vsel %vm379, %v239, 0
      %v540 = vsel %vm379, %v240, 0
      %v543 = vsel %vm379, %v241, 0
      %v546 = vsel %vm428, %v376, 0
      %548 = vmatpush.msra.mxu0 0.0
      %549 = vmatpush.msra.mxu0 0.0
      %550 = vmatpush.msra.mxu0 0.0
      %551 = vmatpush.msra.mxu0 0.0
      %552 = vmatpush.msra.mxu0 0.0
      %553 = vmatpush.msra.mxu0 0.0
      %554 = vmatpush.msra.mxu0 0.0
      %555 = vmatpush.msra.mxu0 0.0
      %556 = vmatpush.msra.mxu0 0.0
      %557 = vmatpush.msra.mxu0 0.0
      %558 = vmatpush.msra.mxu0 0.0
      %559 = vmatpush.msra.mxu0 0.0
      %560 = vmatpush.msra.mxu0 0.0
      %561 = vmatpush.msra.mxu0 0.0
      %562 = vmatpush.msra.mxu0 0.0
      %563 = vmatpush.msra.mxu0 %v546
      %564 = vmatmul.f32.gmra.mxu0 %v498
      %v565 = vpop.f32.mrf.mxu0
      %v566 = vadd.f32 %v450, %v565
      %567 = vmatmul.f32.gmra.mxu0 %v501
      %v568 = vpop.f32.mrf.mxu0
      %v569 = vadd.f32 %v453, %v568
      %570 = vmatmul.f32.gmra.mxu0 %v504
      %v571 = vpop.f32.mrf.mxu0
      %v572 = vadd.f32 %v456, %v571
      %573 = vmatmul.f32.gmra.mxu0 %v507
      %v574 = vpop.f32.mrf.mxu0
      %v575 = vadd.f32 %v459, %v574
      %576 = vmatmul.f32.gmra.mxu0 %v510
      %v577 = vpop.f32.mrf.mxu0
      %v578 = vadd.f32 %v462, %v577
      %579 = vmatmul.f32.gmra.mxu0 %v513
      %v580 = vpop.f32.mrf.mxu0
      %v581 = vadd.f32 %v465, %v580
      %582 = vmatmul.f32.gmra.mxu0 %v516
      %v583 = vpop.f32.mrf.mxu0
      %v584 = vadd.f32 %v468, %v583
      %585 = vmatmul.f32.gmra.mxu0 %v519
      %v586 = vpop.f32.mrf.mxu0
      %v587 = vadd.f32 %v471, %v586
      %588 = vmatmul.f32.gmra.mxu0 %v522
      %v589 = vpop.f32.mrf.mxu0
      %v590 = vadd.f32 %v474, %v589
      %591 = vmatmul.f32.gmra.mxu0 %v525
      %v592 = vpop.f32.mrf.mxu0
      %v593 = vadd.f32 %v477, %v592
      %594 = vmatmul.f32.gmra.mxu0 %v528
      %v595 = vpop.f32.mrf.mxu0
      %v596 = vadd.f32 %v480, %v595
      %597 = vmatmul.f32.gmra.mxu0 %v531
      %v598 = vpop.f32.mrf.mxu0
      %v599 = vadd.f32 %v483, %v598
      %600 = vmatmul.f32.gmra.mxu0 %v534
      %v601 = vpop.f32.mrf.mxu0
      %v602 = vadd.f32 %v486, %v601
      %603 = vmatmul.f32.gmra.mxu0 %v537
      %v604 = vpop.f32.mrf.mxu0
      %v605 = vadd.f32 %v489, %v604
      %606 = vmatmul.f32.gmra.mxu0 %v540
      %v607 = vpop.f32.mrf.mxu0
      %v608 = vadd.f32 %v492, %v607
      %609 = vmatmul.f32.gmra.mxu0 %v543
      %v610 = vpop.f32.mrf.mxu0
      %v611 = vadd.f32 %v495, %v610
      %612 = vdwg.mxu0
      %s613 = scalar_lea.vmem %s1, 8
      %v614 = vld [vmem:[%s613] sm:$0xf]
      %v616 = vsel %vm379, %v258, 0
      %v619 = vsel %vm379, %v259, 0
      %v622 = vsel %vm379, %v260, 0
      %v625 = vsel %vm379, %v261, 0
      %v628 = vsel %vm379, %v262, 0
      %v631 = vsel %vm379, %v263, 0
      %v634 = vsel %vm379, %v264, 0
      %v637 = vsel %vm379, %v265, 0
      %v640 = vsel %vm379, %v266, 0
      %v643 = vsel %vm379, %v267, 0
      %v646 = vsel %vm379, %v268, 0
      %v649 = vsel %vm379, %v269, 0
      %v652 = vsel %vm379, %v270, 0
      %v655 = vsel %vm379, %v271, 0
      %v658 = vsel %vm379, %v272, 0
      %v661 = vsel %vm379, %v273, 0
      %v664 = vsel %vm428, %v614, 0
      %666 = vmatpush.msra.mxu0 0.0
      %667 = vmatpush.msra.mxu0 0.0
      %668 = vmatpush.msra.mxu0 0.0
      %669 = vmatpush.msra.mxu0 0.0
      %670 = vmatpush.msra.mxu0 0.0
      %671 = vmatpush.msra.mxu0 0.0
      %672 = vmatpush.msra.mxu0 0.0
      %673 = vmatpush.msra.mxu0 0.0
      %674 = vmatpush.msra.mxu0 0.0
      %675 = vmatpush.msra.mxu0 0.0
      %676 = vmatpush.msra.mxu0 0.0
      %677 = vmatpush.msra.mxu0 0.0
      %678 = vmatpush.msra.mxu0 0.0
      %679 = vmatpush.msra.mxu0 0.0
      %680 = vmatpush.msra.mxu0 0.0
      %681 = vmatpush.msra.mxu0 %v664
      %682 = vmatmul.f32.gmra.mxu0 %v616
      %v683 = vpop.f32.mrf.mxu0
      %v684 = vadd.f32 0.0, %v683
      %685 = vmatmul.f32.gmra.mxu0 %v619
      %v686 = vpop.f32.mrf.mxu0
      %v687 = vadd.f32 0.0, %v686
      %688 = vmatmul.f32.gmra.mxu0 %v622
      %v689 = vpop.f32.mrf.mxu0
      %v690 = vadd.f32 0.0, %v689
      %691 = vmatmul.f32.gmra.mxu0 %v625
      %v692 = vpop.f32.mrf.mxu0
      %v693 = vadd.f32 0.0, %v692
      %694 = vmatmul.f32.gmra.mxu0 %v628
      %v695 = vpop.f32.mrf.mxu0
      %v696 = vadd.f32 0.0, %v695
      %697 = vmatmul.f32.gmra.mxu0 %v631
      %v698 = vpop.f32.mrf.mxu0
      %v699 = vadd.f32 0.0, %v698
      %700 = vmatmul.f32.gmra.mxu0 %v634
      %v701 = vpop.f32.mrf.mxu0
      %v702 = vadd.f32 0.0, %v701
      %703 = vmatmul.f32.gmra.mxu0 %v637
      %v704 = vpop.f32.mrf.mxu0
      %v705 = vadd.f32 0.0, %v704
      %706 = vmatmul.f32.gmra.mxu0 %v640
      %v707 = vpop.f32.mrf.mxu0
      %v708 = vadd.f32 0.0, %v707
      %709 = vmatmul.f32.gmra.mxu0 %v643
      %v710 = vpop.f32.mrf.mxu0
      %v711 = vadd.f32 0.0, %v710
      %712 = vmatmul.f32.gmra.mxu0 %v646
      %v713 = vpop.f32.mrf.mxu0
      %v714 = vadd.f32 0.0, %v713
      %715 = vmatmul.f32.gmra.mxu0 %v649
      %v716 = vpop.f32.mrf.mxu0
      %v717 = vadd.f32 0.0, %v716
      %718 = vmatmul.f32.gmra.mxu0 %v652
      %v719 = vpop.f32.mrf.mxu0
      %v720 = vadd.f32 0.0, %v719
      %721 = vmatmul.f32.gmra.mxu0 %v655
      %v722 = vpop.f32.mrf.mxu0
      %v723 = vadd.f32 0.0, %v722
      %724 = vmatmul.f32.gmra.mxu0 %v658
      %v725 = vpop.f32.mrf.mxu0
      %v726 = vadd.f32 0.0, %v725
      %727 = vmatmul.f32.gmra.mxu0 %v661
      %v728 = vpop.f32.mrf.mxu0
      %v729 = vadd.f32 0.0, %v728
      %730 = vdwg.mxu0
      %v731 = vadd.f32 %v566, %v684
      %v732 = vadd.f32 %v569, %v687
      %v733 = vadd.f32 %v572, %v690
      %v734 = vadd.f32 %v575, %v693
      %v735 = vadd.f32 %v578, %v696
      %v736 = vadd.f32 %v581, %v699
      %v737 = vadd.f32 %v584, %v702
      %v738 = vadd.f32 %v587, %v705
      %v739 = vadd.f32 %v590, %v708
      %v740 = vadd.f32 %v593, %v711
      %v741 = vadd.f32 %v596, %v714
      %v742 = vadd.f32 %v599, %v717
      %v743 = vadd.f32 %v602, %v720
      %v744 = vadd.f32 %v605, %v723
      %v745 = vadd.f32 %v608, %v726
      %v746 = vadd.f32 %v611, %v729
      %s747 = scalar_lea.vmem %s1, 12
      %v748 = vld [vmem:[%s747] sm:$0xf]
      %v750 = vsel %vm379, %v277, 0
      %v753 = vsel %vm379, %v278, 0
      %v756 = vsel %vm379, %v279, 0
      %v759 = vsel %vm379, %v280, 0
      %v762 = vsel %vm379, %v281, 0
      %v765 = vsel %vm379, %v282, 0
      %v768 = vsel %vm379, %v283, 0
      %v771 = vsel %vm379, %v284, 0
      %v774 = vsel %vm379, %v285, 0
      %v777 = vsel %vm379, %v286, 0
      %v780 = vsel %vm379, %v287, 0
      %v783 = vsel %vm379, %v288, 0
      %v786 = vsel %vm379, %v289, 0
      %v789 = vsel %vm379, %v290, 0
      %v792 = vsel %vm379, %v291, 0
      %v795 = vsel %vm379, %v292, 0
      %v798 = vsel %vm428, %v748, 0
      %800 = vmatpush.msra.mxu0 0.0
      %801 = vmatpush.msra.mxu0 0.0
      %802 = vmatpush.msra.mxu0 0.0
      %803 = vmatpush.msra.mxu0 0.0
      %804 = vmatpush.msra.mxu0 0.0
      %805 = vmatpush.msra.mxu0 0.0
      %806 = vmatpush.msra.mxu0 0.0
      %807 = vmatpush.msra.mxu0 0.0
      %808 = vmatpush.msra.mxu0 0.0
      %809 = vmatpush.msra.mxu0 0.0
      %810 = vmatpush.msra.mxu0 0.0
      %811 = vmatpush.msra.mxu0 0.0
      %812 = vmatpush.msra.mxu0 0.0
      %813 = vmatpush.msra.mxu0 0.0
      %814 = vmatpush.msra.mxu0 0.0
      %815 = vmatpush.msra.mxu0 %v798
      %816 = vmatmul.f32.gmra.mxu0 %v750
      %v817 = vpop.f32.mrf.mxu0
      %v818 = vadd.f32 0.0, %v817
      %819 = vmatmul.f32.gmra.mxu0 %v753
      %v820 = vpop.f32.mrf.mxu0
      %v821 = vadd.f32 0.0, %v820
      %822 = vmatmul.f32.gmra.mxu0 %v756
      %v823 = vpop.f32.mrf.mxu0
      %v824 = vadd.f32 0.0, %v823
      %825 = vmatmul.f32.gmra.mxu0 %v759
      %v826 = vpop.f32.mrf.mxu0
      %v827 = vadd.f32 0.0, %v826
      %828 = vmatmul.f32.gmra.mxu0 %v762
      %v829 = vpop.f32.mrf.mxu0
      %v830 = vadd.f32 0.0, %v829
      %831 = vmatmul.f32.gmra.mxu0 %v765
      %v832 = vpop.f32.mrf.mxu0
      %v833 = vadd.f32 0.0, %v832
      %834 = vmatmul.f32.gmra.mxu0 %v768
      %v835 = vpop.f32.mrf.mxu0
      %v836 = vadd.f32 0.0, %v835
      %837 = vmatmul.f32.gmra.mxu0 %v771
      %v838 = vpop.f32.mrf.mxu0
      %v839 = vadd.f32 0.0, %v838
      %840 = vmatmul.f32.gmra.mxu0 %v774
      %v841 = vpop.f32.mrf.mxu0
      %v842 = vadd.f32 0.0, %v841
      %843 = vmatmul.f32.gmra.mxu0 %v777
      %v844 = vpop.f32.mrf.mxu0
      %v845 = vadd.f32 0.0, %v844
      %846 = vmatmul.f32.gmra.mxu0 %v780
      %v847 = vpop.f32.mrf.mxu0
      %v848 = vadd.f32 0.0, %v847
      %849 = vmatmul.f32.gmra.mxu0 %v783
      %v850 = vpop.f32.mrf.mxu0
      %v851 = vadd.f32 0.0, %v850
      %852 = vmatmul.f32.gmra.mxu0 %v786
      %v853 = vpop.f32.mrf.mxu0
      %v854 = vadd.f32 0.0, %v853
      %855 = vmatmul.f32.gmra.mxu0 %v789
      %v856 = vpop.f32.mrf.mxu0
      %v857 = vadd.f32 0.0, %v856
      %858 = vmatmul.f32.gmra.mxu0 %v792
      %v859 = vpop.f32.mrf.mxu0
      %v860 = vadd.f32 0.0, %v859
      %861 = vmatmul.f32.gmra.mxu0 %v795
      %v862 = vpop.f32.mrf.mxu0
      %v863 = vadd.f32 0.0, %v862
      %864 = vdwg.mxu0
      %v865 = vadd.f32 %v731, %v818
      %v866 = vadd.f32 %v732, %v821
      %v867 = vadd.f32 %v733, %v824
      %v868 = vadd.f32 %v734, %v827
      %v869 = vadd.f32 %v735, %v830
      %v870 = vadd.f32 %v736, %v833
      %v871 = vadd.f32 %v737, %v836
      %v872 = vadd.f32 %v738, %v839
      %v873 = vadd.f32 %v739, %v842
      %v874 = vadd.f32 %v740, %v845
      %v875 = vadd.f32 %v741, %v848
      %v876 = vadd.f32 %v742, %v851
      %v877 = vadd.f32 %v743, %v854
      %v878 = vadd.f32 %v744, %v857
      %v879 = vadd.f32 %v745, %v860
      %v880 = vadd.f32 %v746, %v863
      %s881 = scalar_lea.vmem %s1, 16
      %v882 = vld [vmem:[%s881] sm:$0xf]
      %v884 = vsel %vm379, %v293, 0
      %v887 = vsel %vm379, %v294, 0
      %v890 = vsel %vm379, %v295, 0
      %v893 = vsel %vm379, %v296, 0
      %v896 = vsel %vm379, %v297, 0
      %v899 = vsel %vm379, %v298, 0
      %v902 = vsel %vm379, %v299, 0
      %v905 = vsel %vm379, %v300, 0
      %v908 = vsel %vm379, %v301, 0
      %v911 = vsel %vm379, %v302, 0
      %v914 = vsel %vm379, %v303, 0
      %v917 = vsel %vm379, %v304, 0
      %v920 = vsel %vm379, %v305, 0
      %v923 = vsel %vm379, %v306, 0
      %v926 = vsel %vm379, %v307, 0
      %v929 = vsel %vm379, %v308, 0
      %v932 = vsel %vm428, %v882, 0
      %934 = vmatpush.msra.mxu0 0.0
      %935 = vmatpush.msra.mxu0 0.0
      %936 = vmatpush.msra.mxu0 0.0
      %937 = vmatpush.msra.mxu0 0.0
      %938 = vmatpush.msra.mxu0 0.0
      %939 = vmatpush.msra.mxu0 0.0
      %940 = vmatpush.msra.mxu0 0.0
      %941 = vmatpush.msra.mxu0 0.0
      %942 = vmatpush.msra.mxu0 0.0
      %943 = vmatpush.msra.mxu0 0.0
      %944 = vmatpush.msra.mxu0 0.0
      %945 = vmatpush.msra.mxu0 0.0
      %946 = vmatpush.msra.mxu0 0.0
      %947 = vmatpush.msra.mxu0 0.0
      %948 = vmatpush.msra.mxu0 0.0
      %949 = vmatpush.msra.mxu0 %v932
      %950 = vmatmul.f32.gmra.mxu0 %v884
      %v951 = vpop.f32.mrf.mxu0
      %v952 = vadd.f32 0.0, %v951
      %953 = vmatmul.f32.gmra.mxu0 %v887
      %v954 = vpop.f32.mrf.mxu0
      %v955 = vadd.f32 0.0, %v954
      %956 = vmatmul.f32.gmra.mxu0 %v890
      %v957 = vpop.f32.mrf.mxu0
      %v958 = vadd.f32 0.0, %v957
      %959 = vmatmul.f32.gmra.mxu0 %v893
      %v960 = vpop.f32.mrf.mxu0
      %v961 = vadd.f32 0.0, %v960
      %962 = vmatmul.f32.gmra.mxu0 %v896
      %v963 = vpop.f32.mrf.mxu0
      %v964 = vadd.f32 0.0, %v963
      %965 = vmatmul.f32.gmra.mxu0 %v899
      %v966 = vpop.f32.mrf.mxu0
      %v967 = vadd.f32 0.0, %v966
      %968 = vmatmul.f32.gmra.mxu0 %v902
      %v969 = vpop.f32.mrf.mxu0
      %v970 = vadd.f32 0.0, %v969
      %971 = vmatmul.f32.gmra.mxu0 %v905
      %v972 = vpop.f32.mrf.mxu0
      %v973 = vadd.f32 0.0, %v972
      %974 = vmatmul.f32.gmra.mxu0 %v908
      %v975 = vpop.f32.mrf.mxu0
      %v976 = vadd.f32 0.0, %v975
      %977 = vmatmul.f32.gmra.mxu0 %v911
      %v978 = vpop.f32.mrf.mxu0
      %v979 = vadd.f32 0.0, %v978
      %980 = vmatmul.f32.gmra.mxu0 %v914
      %v981 = vpop.f32.mrf.mxu0
      %v982 = vadd.f32 0.0, %v981
      %983 = vmatmul.f32.gmra.mxu0 %v917
      %v984 = vpop.f32.mrf.mxu0
      %v985 = vadd.f32 0.0, %v984
      %986 = vmatmul.f32.gmra.mxu0 %v920
      %v987 = vpop.f32.mrf.mxu0
      %v988 = vadd.f32 0.0, %v987
      %989 = vmatmul.f32.gmra.mxu0 %v923
      %v990 = vpop.f32.mrf.mxu0
      %v991 = vadd.f32 0.0, %v990
      %992 = vmatmul.f32.gmra.mxu0 %v926
      %v993 = vpop.f32.mrf.mxu0
      %v994 = vadd.f32 0.0, %v993
      %995 = vmatmul.f32.gmra.mxu0 %v929
      %v996 = vpop.f32.mrf.mxu0
      %v997 = vadd.f32 0.0, %v996
      %998 = vdwg.mxu0
      %v999 = vadd.f32 %v865, %v952
      %v1000 = vadd.f32 %v866, %v955
      %v1001 = vadd.f32 %v867, %v958
      %v1002 = vadd.f32 %v868, %v961
      %v1003 = vadd.f32 %v869, %v964
      %v1004 = vadd.f32 %v870, %v967
      %v1005 = vadd.f32 %v871, %v970
      %v1006 = vadd.f32 %v872, %v973
      %v1007 = vadd.f32 %v873, %v976
      %v1008 = vadd.f32 %v874, %v979
      %v1009 = vadd.f32 %v875, %v982
      %v1010 = vadd.f32 %v876, %v985
      %v1011 = vadd.f32 %v877, %v988
      %v1012 = vadd.f32 %v878, %v991
      %v1013 = vadd.f32 %v879, %v994
      %v1014 = vadd.f32 %v880, %v997
      %s1015 = scalar_lea.vmem %s1, 20
      %v1016 = vld [vmem:[%s1015] sm:$0xf]
      %v1018 = vsel %vm379, %v309, 0
      %v1021 = vsel %vm379, %v310, 0
      %v1024 = vsel %vm379, %v311, 0
      %v1027 = vsel %vm379, %v312, 0
      %v1030 = vsel %vm379, %v313, 0
      %v1033 = vsel %vm379, %v314, 0
      %v1036 = vsel %vm379, %v315, 0
      %v1039 = vsel %vm379, %v316, 0
      %v1042 = vsel %vm379, %v317, 0
      %v1045 = vsel %vm379, %v318, 0
      %v1048 = vsel %vm379, %v319, 0
      %v1051 = vsel %vm379, %v320, 0
      %v1054 = vsel %vm379, %v321, 0
      %v1057 = vsel %vm379, %v322, 0
      %v1060 = vsel %vm379, %v323, 0
      %v1063 = vsel %vm379, %v324, 0
      %v1066 = vsel %vm428, %v1016, 0
      %1068 = vmatpush.msra.mxu0 0.0
      %1069 = vmatpush.msra.mxu0 0.0
      %1070 = vmatpush.msra.mxu0 0.0
      %1071 = vmatpush.msra.mxu0 0.0
      %1072 = vmatpush.msra.mxu0 0.0
      %1073 = vmatpush.msra.mxu0 0.0
      %1074 = vmatpush.msra.mxu0 0.0
      %1075 = vmatpush.msra.mxu0 0.0
      %1076 = vmatpush.msra.mxu0 0.0
      %1077 = vmatpush.msra.mxu0 0.0
      %1078 = vmatpush.msra.mxu0 0.0
      %1079 = vmatpush.msra.mxu0 0.0
      %1080 = vmatpush.msra.mxu0 0.0
      %1081 = vmatpush.msra.mxu0 0.0
      %1082 = vmatpush.msra.mxu0 0.0
      %1083 = vmatpush.msra.mxu0 %v1066
      %1084 = vmatmul.f32.gmra.mxu0 %v1018
      %v1085 = vpop.f32.mrf.mxu0
      %v1086 = vadd.f32 0.0, %v1085
      %1087 = vmatmul.f32.gmra.mxu0 %v1021
      %v1088 = vpop.f32.mrf.mxu0
      %v1089 = vadd.f32 0.0, %v1088
      %1090 = vmatmul.f32.gmra.mxu0 %v1024
      %v1091 = vpop.f32.mrf.mxu0
      %v1092 = vadd.f32 0.0, %v1091
      %1093 = vmatmul.f32.gmra.mxu0 %v1027
      %v1094 = vpop.f32.mrf.mxu0
      %v1095 = vadd.f32 0.0, %v1094
      %1096 = vmatmul.f32.gmra.mxu0 %v1030
      %v1097 = vpop.f32.mrf.mxu0
      %v1098 = vadd.f32 0.0, %v1097
      %1099 = vmatmul.f32.gmra.mxu0 %v1033
      %v1100 = vpop.f32.mrf.mxu0
      %v1101 = vadd.f32 0.0, %v1100
      %1102 = vmatmul.f32.gmra.mxu0 %v1036
      %v1103 = vpop.f32.mrf.mxu0
      %v1104 = vadd.f32 0.0, %v1103
      %1105 = vmatmul.f32.gmra.mxu0 %v1039
      %v1106 = vpop.f32.mrf.mxu0
      %v1107 = vadd.f32 0.0, %v1106
      %1108 = vmatmul.f32.gmra.mxu0 %v1042
      %v1109 = vpop.f32.mrf.mxu0
      %v1110 = vadd.f32 0.0, %v1109
      %1111 = vmatmul.f32.gmra.mxu0 %v1045
      %v1112 = vpop.f32.mrf.mxu0
      %v1113 = vadd.f32 0.0, %v1112
      %1114 = vmatmul.f32.gmra.mxu0 %v1048
      %v1115 = vpop.f32.mrf.mxu0
      %v1116 = vadd.f32 0.0, %v1115
      %1117 = vmatmul.f32.gmra.mxu0 %v1051
      %v1118 = vpop.f32.mrf.mxu0
      %v1119 = vadd.f32 0.0, %v1118
      %1120 = vmatmul.f32.gmra.mxu0 %v1054
      %v1121 = vpop.f32.mrf.mxu0
      %v1122 = vadd.f32 0.0, %v1121
      %1123 = vmatmul.f32.gmra.mxu0 %v1057
      %v1124 = vpop.f32.mrf.mxu0
      %v1125 = vadd.f32 0.0, %v1124
      %1126 = vmatmul.f32.gmra.mxu0 %v1060
      %v1127 = vpop.f32.mrf.mxu0
      %v1128 = vadd.f32 0.0, %v1127
      %1129 = vmatmul.f32.gmra.mxu0 %v1063
      %v1130 = vpop.f32.mrf.mxu0
      %v1131 = vadd.f32 0.0, %v1130
      %1132 = vdwg.mxu0
      %v1133 = vadd.f32 %v999, %v1086
      %v1134 = vadd.f32 %v1000, %v1089
      %v1135 = vadd.f32 %v1001, %v1092
      %v1136 = vadd.f32 %v1002, %v1095
      %v1137 = vadd.f32 %v1003, %v1098
      %v1138 = vadd.f32 %v1004, %v1101
      %v1139 = vadd.f32 %v1005, %v1104
      %v1140 = vadd.f32 %v1006, %v1107
      %v1141 = vadd.f32 %v1007, %v1110
      %v1142 = vadd.f32 %v1008, %v1113
      %v1143 = vadd.f32 %v1009, %v1116
      %v1144 = vadd.f32 %v1010, %v1119
      %v1145 = vadd.f32 %v1011, %v1122
      %v1146 = vadd.f32 %v1012, %v1125
      %v1147 = vadd.f32 %v1013, %v1128
      %v1148 = vadd.f32 %v1014, %v1131
      %s1149 = scalar_lea.vmem %s1, 24
      %v1150 = vld [vmem:[%s1149] sm:$0xf]
      %v1152 = vsel %vm379, %v328, 0
      %v1155 = vsel %vm379, %v329, 0
      %v1158 = vsel %vm379, %v330, 0
      %v1161 = vsel %vm379, %v331, 0
      %v1164 = vsel %vm379, %v332, 0
      %v1167 = vsel %vm379, %v333, 0
      %v1170 = vsel %vm379, %v334, 0
      %v1173 = vsel %vm379, %v335, 0
      %v1176 = vsel %vm379, %v336, 0
      %v1179 = vsel %vm379, %v337, 0
      %v1182 = vsel %vm379, %v338, 0
      %v1185 = vsel %vm379, %v339, 0
      %v1188 = vsel %vm379, %v340, 0
      %v1191 = vsel %vm379, %v341, 0
      %v1194 = vsel %vm379, %v342, 0
      %v1197 = vsel %vm379, %v343, 0
      %v1200 = vsel %vm428, %v1150, 0
      %1202 = vmatpush.msra.mxu0 0.0
      %1203 = vmatpush.msra.mxu0 0.0
      %1204 = vmatpush.msra.mxu0 0.0
      %1205 = vmatpush.msra.mxu0 0.0
      %1206 = vmatpush.msra.mxu0 0.0
      %1207 = vmatpush.msra.mxu0 0.0
      %1208 = vmatpush.msra.mxu0 0.0
      %1209 = vmatpush.msra.mxu0 0.0
      %1210 = vmatpush.msra.mxu0 0.0
      %1211 = vmatpush.msra.mxu0 0.0
      %1212 = vmatpush.msra.mxu0 0.0
      %1213 = vmatpush.msra.mxu0 0.0
      %1214 = vmatpush.msra.mxu0 0.0
      %1215 = vmatpush.msra.mxu0 0.0
      %1216 = vmatpush.msra.mxu0 0.0
      %1217 = vmatpush.msra.mxu0 %v1200
      %1218 = vmatmul.f32.gmra.mxu0 %v1152
      %v1219 = vpop.f32.mrf.mxu0
      %v1220 = vadd.f32 0.0, %v1219
      %1221 = vmatmul.f32.gmra.mxu0 %v1155
      %v1222 = vpop.f32.mrf.mxu0
      %v1223 = vadd.f32 0.0, %v1222
      %1224 = vmatmul.f32.gmra.mxu0 %v1158
      %v1225 = vpop.f32.mrf.mxu0
      %v1226 = vadd.f32 0.0, %v1225
      %1227 = vmatmul.f32.gmra.mxu0 %v1161
      %v1228 = vpop.f32.mrf.mxu0
      %v1229 = vadd.f32 0.0, %v1228
      %1230 = vmatmul.f32.gmra.mxu0 %v1164
      %v1231 = vpop.f32.mrf.mxu0
      %v1232 = vadd.f32 0.0, %v1231
      %1233 = vmatmul.f32.gmra.mxu0 %v1167
      %v1234 = vpop.f32.mrf.mxu0
      %v1235 = vadd.f32 0.0, %v1234
      %1236 = vmatmul.f32.gmra.mxu0 %v1170
      %v1237 = vpop.f32.mrf.mxu0
      %v1238 = vadd.f32 0.0, %v1237
      %1239 = vmatmul.f32.gmra.mxu0 %v1173
      %v1240 = vpop.f32.mrf.mxu0
      %v1241 = vadd.f32 0.0, %v1240
      %1242 = vmatmul.f32.gmra.mxu0 %v1176
      %v1243 = vpop.f32.mrf.mxu0
      %v1244 = vadd.f32 0.0, %v1243
      %1245 = vmatmul.f32.gmra.mxu0 %v1179
      %v1246 = vpop.f32.mrf.mxu0
      %v1247 = vadd.f32 0.0, %v1246
      %1248 = vmatmul.f32.gmra.mxu0 %v1182
      %v1249 = vpop.f32.mrf.mxu0
      %v1250 = vadd.f32 0.0, %v1249
      %1251 = vmatmul.f32.gmra.mxu0 %v1185
      %v1252 = vpop.f32.mrf.mxu0
      %v1253 = vadd.f32 0.0, %v1252
      %1254 = vmatmul.f32.gmra.mxu0 %v1188
      %v1255 = vpop.f32.mrf.mxu0
      %v1256 = vadd.f32 0.0, %v1255
      %1257 = vmatmul.f32.gmra.mxu0 %v1191
      %v1258 = vpop.f32.mrf.mxu0
      %v1259 = vadd.f32 0.0, %v1258
      %1260 = vmatmul.f32.gmra.mxu0 %v1194
      %v1261 = vpop.f32.mrf.mxu0
      %v1262 = vadd.f32 0.0, %v1261
      %1263 = vmatmul.f32.gmra.mxu0 %v1197
      %v1264 = vpop.f32.mrf.mxu0
      %v1265 = vadd.f32 0.0, %v1264
      %1266 = vdwg.mxu0
      %v1267 = vadd.f32 %v1133, %v1220
      %v1268 = vadd.f32 %v1134, %v1223
      %v1269 = vadd.f32 %v1135, %v1226
      %v1270 = vadd.f32 %v1136, %v1229
      %v1271 = vadd.f32 %v1137, %v1232
      %v1272 = vadd.f32 %v1138, %v1235
      %v1273 = vadd.f32 %v1139, %v1238
      %v1274 = vadd.f32 %v1140, %v1241
      %v1275 = vadd.f32 %v1141, %v1244
      %v1276 = vadd.f32 %v1142, %v1247
      %v1277 = vadd.f32 %v1143, %v1250
      %v1278 = vadd.f32 %v1144, %v1253
      %v1279 = vadd.f32 %v1145, %v1256
      %v1280 = vadd.f32 %v1146, %v1259
      %v1281 = vadd.f32 %v1147, %v1262
      %v1282 = vadd.f32 %v1148, %v1265
      %s1283 = scalar_lea.vmem %s1, 28
      %v1284 = vld [vmem:[%s1283] sm:$0xf]
      %v1286 = vsel %vm379, %v344, 0
      %v1289 = vsel %vm379, %v345, 0
      %v1292 = vsel %vm379, %v346, 0
      %v1295 = vsel %vm379, %v347, 0
      %v1298 = vsel %vm379, %v348, 0
      %v1301 = vsel %vm379, %v349, 0
      %v1304 = vsel %vm379, %v350, 0
      %v1307 = vsel %vm379, %v351, 0
      %v1310 = vsel %vm379, %v352, 0
      %v1313 = vsel %vm379, %v353, 0
      %v1316 = vsel %vm379, %v354, 0
      %v1319 = vsel %vm379, %v355, 0
      %v1322 = vsel %vm379, %v356, 0
      %v1325 = vsel %vm379, %v357, 0
      %v1328 = vsel %vm379, %v358, 0
      %v1331 = vsel %vm379, %v359, 0
      %v1334 = vsel %vm428, %v1284, 0
      %1336 = vmatpush.msra.mxu0 0.0
      %1337 = vmatpush.msra.mxu0 0.0
      %1338 = vmatpush.msra.mxu0 0.0
      %1339 = vmatpush.msra.mxu0 0.0
      %1340 = vmatpush.msra.mxu0 0.0
      %1341 = vmatpush.msra.mxu0 0.0
      %1342 = vmatpush.msra.mxu0 0.0
      %1343 = vmatpush.msra.mxu0 0.0
      %1344 = vmatpush.msra.mxu0 0.0
      %1345 = vmatpush.msra.mxu0 0.0
      %1346 = vmatpush.msra.mxu0 0.0
      %1347 = vmatpush.msra.mxu0 0.0
      %1348 = vmatpush.msra.mxu0 0.0
      %1349 = vmatpush.msra.mxu0 0.0
      %1350 = vmatpush.msra.mxu0 0.0
      %1351 = vmatpush.msra.mxu0 %v1334
      %1352 = vmatmul.f32.gmra.mxu0 %v1286
      %v1353 = vpop.f32.mrf.mxu0
      %v1354 = vadd.f32 0.0, %v1353
      %1355 = vmatmul.f32.gmra.mxu0 %v1289
      %v1356 = vpop.f32.mrf.mxu0
      %v1357 = vadd.f32 0.0, %v1356
      %1358 = vmatmul.f32.gmra.mxu0 %v1292
      %v1359 = vpop.f32.mrf.mxu0
      %v1360 = vadd.f32 0.0, %v1359
      %1361 = vmatmul.f32.gmra.mxu0 %v1295
      %v1362 = vpop.f32.mrf.mxu0
      %v1363 = vadd.f32 0.0, %v1362
      %1364 = vmatmul.f32.gmra.mxu0 %v1298
      %v1365 = vpop.f32.mrf.mxu0
      %v1366 = vadd.f32 0.0, %v1365
      %1367 = vmatmul.f32.gmra.mxu0 %v1301
      %v1368 = vpop.f32.mrf.mxu0
      %v1369 = vadd.f32 0.0, %v1368
      %1370 = vmatmul.f32.gmra.mxu0 %v1304
      %v1371 = vpop.f32.mrf.mxu0
      %v1372 = vadd.f32 0.0, %v1371
      %1373 = vmatmul.f32.gmra.mxu0 %v1307
      %v1374 = vpop.f32.mrf.mxu0
      %v1375 = vadd.f32 0.0, %v1374
      %1376 = vmatmul.f32.gmra.mxu0 %v1310
      %v1377 = vpop.f32.mrf.mxu0
      %v1378 = vadd.f32 0.0, %v1377
      %1379 = vmatmul.f32.gmra.mxu0 %v1313
      %v1380 = vpop.f32.mrf.mxu0
      %v1381 = vadd.f32 0.0, %v1380
      %1382 = vmatmul.f32.gmra.mxu0 %v1316
      %v1383 = vpop.f32.mrf.mxu0
      %v1384 = vadd.f32 0.0, %v1383
      %1385 = vmatmul.f32.gmra.mxu0 %v1319
      %v1386 = vpop.f32.mrf.mxu0
      %v1387 = vadd.f32 0.0, %v1386
      %1388 = vmatmul.f32.gmra.mxu0 %v1322
      %v1389 = vpop.f32.mrf.mxu0
      %v1390 = vadd.f32 0.0, %v1389
      %1391 = vmatmul.f32.gmra.mxu0 %v1325
      %v1392 = vpop.f32.mrf.mxu0
      %v1393 = vadd.f32 0.0, %v1392
      %1394 = vmatmul.f32.gmra.mxu0 %v1328
      %v1395 = vpop.f32.mrf.mxu0
      %v1396 = vadd.f32 0.0, %v1395
      %1397 = vmatmul.f32.gmra.mxu0 %v1331
      %v1398 = vpop.f32.mrf.mxu0
      %v1399 = vadd.f32 0.0, %v1398
      %1400 = vdwg.mxu0
      %v1401 = vadd.f32 %v1267, %v1354
      %v1402 = vadd.f32 %v1268, %v1357
      %v1403 = vadd.f32 %v1269, %v1360
      %v1404 = vadd.f32 %v1270, %v1363
      %v1405 = vadd.f32 %v1271, %v1366
      %v1406 = vadd.f32 %v1272, %v1369
      %v1407 = vadd.f32 %v1273, %v1372
      %v1408 = vadd.f32 %v1274, %v1375
      %v1409 = vadd.f32 %v1275, %v1378
      %v1410 = vadd.f32 %v1276, %v1381
      %v1411 = vadd.f32 %v1277, %v1384
      %v1412 = vadd.f32 %v1278, %v1387
      %v1413 = vadd.f32 %v1279, %v1390
      %v1414 = vadd.f32 %v1280, %v1393
      %v1415 = vadd.f32 %v1281, %v1396
      %v1416 = vadd.f32 %v1282, %v1399
      %s1417 = scalar_lea.vmem %s1, 32
      %v1418 = vld [vmem:[%s1417] sm:$0xf]
      %v1420 = vsel %vm379, %v360, 0
      %v1423 = vsel %vm379, %v361, 0
      %v1426 = vsel %vm379, %v362, 0
      %v1429 = vsel %vm379, %v363, 0
      %v1432 = vsel %vm379, %v364, 0
      %v1435 = vsel %vm379, %v365, 0
      %v1438 = vsel %vm379, %v366, 0
      %v1441 = vsel %vm379, %v367, 0
      %v1444 = vsel %vm379, %v368, 0
      %v1447 = vsel %vm379, %v369, 0
      %v1450 = vsel %vm379, %v370, 0
      %v1453 = vsel %vm379, %v371, 0
      %v1456 = vsel %vm379, %v372, 0
      %v1459 = vsel %vm379, %v373, 0
      %v1462 = vsel %vm379, %v374, 0
      %v1465 = vsel %vm379, %v375, 0
      %v1468 = vsel %vm428, %v1418, 0
      %1470 = vmatpush.msra.mxu0 0.0
      %1471 = vmatpush.msra.mxu0 0.0
      %1472 = vmatpush.msra.mxu0 0.0
      %1473 = vmatpush.msra.mxu0 0.0
      %1474 = vmatpush.msra.mxu0 0.0
      %1475 = vmatpush.msra.mxu0 0.0
      %1476 = vmatpush.msra.mxu0 0.0
      %1477 = vmatpush.msra.mxu0 0.0
      %1478 = vmatpush.msra.mxu0 0.0
      %1479 = vmatpush.msra.mxu0 0.0
      %1480 = vmatpush.msra.mxu0 0.0
      %1481 = vmatpush.msra.mxu0 0.0
      %1482 = vmatpush.msra.mxu0 0.0
      %1483 = vmatpush.msra.mxu0 0.0
      %1484 = vmatpush.msra.mxu0 0.0
      %1485 = vmatpush.msra.mxu0 %v1468
      %1486 = vmatmul.f32.gmra.mxu0 %v1420
      %v1487 = vpop.f32.mrf.mxu0
      %v1488 = vadd.f32 0.0, %v1487
      %1489 = vmatmul.f32.gmra.mxu0 %v1423
      %v1490 = vpop.f32.mrf.mxu0
      %v1491 = vadd.f32 0.0, %v1490
      %1492 = vmatmul.f32.gmra.mxu0 %v1426
      %v1493 = vpop.f32.mrf.mxu0
      %v1494 = vadd.f32 0.0, %v1493
      %1495 = vmatmul.f32.gmra.mxu0 %v1429
      %v1496 = vpop.f32.mrf.mxu0
      %v1497 = vadd.f32 0.0, %v1496
      %1498 = vmatmul.f32.gmra.mxu0 %v1432
      %v1499 = vpop.f32.mrf.mxu0
      %v1500 = vadd.f32 0.0, %v1499
      %1501 = vmatmul.f32.gmra.mxu0 %v1435
      %v1502 = vpop.f32.mrf.mxu0
      %v1503 = vadd.f32 0.0, %v1502
      %1504 = vmatmul.f32.gmra.mxu0 %v1438
      %v1505 = vpop.f32.mrf.mxu0
      %v1506 = vadd.f32 0.0, %v1505
      %1507 = vmatmul.f32.gmra.mxu0 %v1441
      %v1508 = vpop.f32.mrf.mxu0
      %v1509 = vadd.f32 0.0, %v1508
      %1510 = vmatmul.f32.gmra.mxu0 %v1444
      %v1511 = vpop.f32.mrf.mxu0
      %v1512 = vadd.f32 0.0, %v1511
      %1513 = vmatmul.f32.gmra.mxu0 %v1447
      %v1514 = vpop.f32.mrf.mxu0
      %v1515 = vadd.f32 0.0, %v1514
      %1516 = vmatmul.f32.gmra.mxu0 %v1450
      %v1517 = vpop.f32.mrf.mxu0
      %v1518 = vadd.f32 0.0, %v1517
      %1519 = vmatmul.f32.gmra.mxu0 %v1453
      %v1520 = vpop.f32.mrf.mxu0
      %v1521 = vadd.f32 0.0, %v1520
      %1522 = vmatmul.f32.gmra.mxu0 %v1456
      %v1523 = vpop.f32.mrf.mxu0
      %v1524 = vadd.f32 0.0, %v1523
      %1525 = vmatmul.f32.gmra.mxu0 %v1459
      %v1526 = vpop.f32.mrf.mxu0
      %v1527 = vadd.f32 0.0, %v1526
      %1528 = vmatmul.f32.gmra.mxu0 %v1462
      %v1529 = vpop.f32.mrf.mxu0
      %v1530 = vadd.f32 0.0, %v1529
      %1531 = vmatmul.f32.gmra.mxu0 %v1465
      %v1532 = vpop.f32.mrf.mxu0
      %v1533 = vadd.f32 0.0, %v1532
      %1534 = vdwg.mxu0
      %v1535 = vadd.f32 %v1401, %v1488
      %v1536 = vadd.f32 %v1402, %v1491
      %v1537 = vadd.f32 %v1403, %v1494
      %v1538 = vadd.f32 %v1404, %v1497
      %v1539 = vadd.f32 %v1405, %v1500
      %v1540 = vadd.f32 %v1406, %v1503
      %v1541 = vadd.f32 %v1407, %v1506
      %v1542 = vadd.f32 %v1408, %v1509
      %v1543 = vadd.f32 %v1409, %v1512
      %v1544 = vadd.f32 %v1410, %v1515
      %v1545 = vadd.f32 %v1411, %v1518
      %v1546 = vadd.f32 %v1412, %v1521
      %v1547 = vadd.f32 %v1413, %v1524
      %v1548 = vadd.f32 %v1414, %v1527
      %v1549 = vadd.f32 %v1415, %v1530
      %v1550 = vadd.f32 %v1416, %v1533
      %v1551 = vld [vmem:[%s2] sm:$0x1]
      %v1553 = vperm.slane %v1551, 0
      %v1555 = vmul.f32 %v1535, %v1553
      %v1556 = vmul.f32 %v1536, %v1553
      %v1557 = vmul.f32 %v1537, %v1553
      %v1558 = vmul.f32 %v1538, %v1553
      %v1559 = vmul.f32 %v1539, %v1553
      %v1560 = vmul.f32 %v1540, %v1553
      %v1561 = vmul.f32 %v1541, %v1553
      %v1562 = vmul.f32 %v1542, %v1553
      %v1563 = vmul.f32 %v1543, %v1553
      %v1564 = vmul.f32 %v1544, %v1553
      %v1565 = vmul.f32 %v1545, %v1553
      %v1566 = vmul.f32 %v1546, %v1553
      %v1567 = vmul.f32 %v1547, %v1553
      %v1568 = vmul.f32 %v1548, %v1553
      %v1569 = vmul.f32 %v1549, %v1553
      %v1570 = vmul.f32 %v1550, %v1553
      %v1571 = vld [vmem:[%s3] sm:$0x1]
      %v1573 = vperm.slane %v1571, 0
      %v1575 = vadd.f32 %v1555, %v1573
      %v1576 = vadd.f32 %v1556, %v1573
      %v1577 = vadd.f32 %v1557, %v1573
      %v1578 = vadd.f32 %v1558, %v1573
      %v1579 = vadd.f32 %v1559, %v1573
      %v1580 = vadd.f32 %v1560, %v1573
      %v1581 = vadd.f32 %v1561, %v1573
      %v1582 = vadd.f32 %v1562, %v1573
      %v1583 = vadd.f32 %v1563, %v1573
      %v1584 = vadd.f32 %v1564, %v1573
      %v1585 = vadd.f32 %v1565, %v1573
      %v1586 = vadd.f32 %v1566, %v1573
      %v1587 = vadd.f32 %v1567, %v1573
      %v1588 = vadd.f32 %v1568, %v1573
      %v1589 = vadd.f32 %v1569, %v1573
      %v1590 = vadd.f32 %v1570, %v1573
      %1591 = vst [vmem:[%s221] sm:$0xff] %v1575
      %1592 = vst [vmem:[%s221 + $0x8] sm:$0xff] %v1576
      %1593 = vst [vmem:[%s221 + $0x10] sm:$0xff] %v1577
      %1594 = vst [vmem:[%s221 + $0x18] sm:$0xff] %v1578
      %1595 = vst [vmem:[%s221 + $0x20] sm:$0xff] %v1579
      %1596 = vst [vmem:[%s221 + $0x28] sm:$0xff] %v1580
      %1597 = vst [vmem:[%s221 + $0x30] sm:$0xff] %v1581
      %1598 = vst [vmem:[%s221 + $0x38] sm:$0xff] %v1582
      %1599 = vst [vmem:[%s221 + $0x40] sm:$0xff] %v1583
      %1600 = vst [vmem:[%s221 + $0x48] sm:$0xff] %v1584
      %1601 = vst [vmem:[%s221 + $0x50] sm:$0xff] %v1585
      %1602 = vst [vmem:[%s221 + $0x58] sm:$0xff] %v1586
      %1603 = vst [vmem:[%s221 + $0x60] sm:$0xff] %v1587
      %1604 = vst [vmem:[%s221 + $0x68] sm:$0xff] %v1588
      %1605 = vst [vmem:[%s221 + $0x70] sm:$0xff] %v1589
      %1606 = vst [vmem:[%s221 + $0x78] sm:$0xff] %v1590
      %s1607 = smul.u32 8, %s20
      %p1608 = scmp.lt.s32.totalorder %s19, 1
      %s1609 = scalar_select %p1608, %s19, 1
      %p1610 = scmp.lt.s32.totalorder %s1607, 15
      %s1611 = scalar_select %p1610, %s1607, 15
      %s1612 = smul.addr %s1611, 2
      %s1613 = smul.addr %s1609, 32
      %s1614 = sadd.s32 %s1612, %s1613
      %s1615 = smul.addr %s1614, 8
      %s1616 = scalar_lea.vmem %s4, %s1615
      // Predicated region
      $region37: #{_wn_conv2d_impl.1} parent=35 // pred_check
        %p1617 = pneg %p136
      $region38: #{_wn_conv2d_impl.1} parent=35 // pred_check_branch
        %1619 = sbr.rel (%p1617) target = $region40
      $region39: #{_wn_conv2d_impl.1} parent=35 // pred_region
        %s1620 = smul.u32 8, %s20
      $region40: #{_wn_conv2d_impl.1} parent=35 // pred_fallthru
        _
    $region36: #{_wn_conv2d_impl.1} parent=5 // pred_fallthru
      _
    %p1621 = scmp.le.s32.totalorder 2, %s10
    // Predicated region
    $region41: #{_wn_conv2d_impl.1} parent=5 // pred_check
      %p1622 = pneg %p1621
    $region42: #{_wn_conv2d_impl.1} parent=5 // pred_check_branch
      %1624 = sbr.rel (%p1622) target = $region44
    $region43: #{_wn_conv2d_impl.1} parent=5 // pred_region
      %s1625 = ssub.s32 %s10, 2
      // Predicated region
      $region45: #{_wn_conv2d_impl.1} parent=43 // pred_check
        %p1626 = pneg %p142
      $region46: #{_wn_conv2d_impl.1} parent=43 // pred_check_branch
        %1628 = sbr.rel (%p1626) target = $region48
      $region47: #{_wn_conv2d_impl.1} parent=43 // pred_region
        %s1629 = smul.u32 8, %s22
        %p1630 = scmp.lt.s32.totalorder %s21, 1
        %s1631 = scalar_select %p1630, %s21, 1
        %p1632 = scmp.lt.s32.totalorder %s1629, 15
        %s1633 = scalar_select %p1632, %s1629, 15
        %s1634 = smul.addr %s1633, 2
        %s1635 = smul.addr %s1631, 32
        %s1636 = sadd.s32 %s1634, %s1635
        %s1637 = smul.addr %s1636, 8
        %s1638 = scalar_lea.vmem %s4, %s1637
      $region48: #{_wn_conv2d_impl.1} parent=43 // pred_fallthru
        _
    $region44: #{_wn_conv2d_impl.1} parent=5 // pred_fallthru
      _
  $region6: #{_wn_conv2d_impl.1} parent=0 // loop_footer
    %s14 = sadd.s32 1, %s10
  $region7: #{_wn_conv2d_impl.1} parent=0 // loop_footer_branch
    %9 = sbr.rel target = $region3
  $region8: #{_wn_conv2d_impl.1} parent=0 // loop_exit
    _

</llo_original>
